<compile_context>
chip_gen: v6e
topology: v6e:2x2x1
jax: 0.10.0
libtpu: 0.0.40
codegen_flags: <defaults>
</compile_context>

<pallas_src>
import functools

import numpy as np
import jax
import jax.numpy as jnp
from jax import lax
from jax.experimental import pallas as pl
from jax.experimental.pallas import tpu as pltpu


def _lstm_kernel(h0_ref, c0_ref, w_hh_ref, pre_ref,
                 out_ref, hn_ref, cn_ref,
                 h_sc, c_sc,
                 *, hidden, t_block, seq_len, needs_mask):
    chunk = pl.program_id(0)

    # Initialize the carried state from (h0, c0) on the first chunk.
    @pl.when(chunk == 0)
    def _():
        h_sc[...] = h0_ref[...].astype(jnp.float32)
        c_sc[...] = c0_ref[...].astype(jnp.float32)

    w_hh = w_hh_ref[...]          # (H, 4H), resident in VMEM for the whole chunk
    H = hidden

    def step(lt, carry):
        h, c = carry              # f32 (B_pad, H), carried in vregs across steps

        # gates = [x_t @ W_ih^T + b]  (precomputed, streamed)  +  h @ W_hh^T  (MXU)
        gates = pre_ref[lt].astype(jnp.float32) + jnp.dot(
            h.astype(w_hh.dtype), w_hh, preferred_element_type=jnp.float32)

        # Two full-tile transcendental pushes (gates is (B_pad, 4H) == one vreg
        # when 4H == 128) instead of four partial ones; then slice [i, f, g, o].
        sig = jax.nn.sigmoid(gates)
        tnh = jnp.tanh(gates)
        i_g = sig[:, 0 * H:1 * H]
        f_g = sig[:, 1 * H:2 * H]
        g_g = tnh[:, 2 * H:3 * H]
        o_g = sig[:, 3 * H:4 * H]

        c_new = f_g * c + i_g * g_g
        h_new = o_g * jnp.tanh(c_new)

        # Per-step store into the chunk's VMEM output block; Pallas writes the
        # whole (T_block, B_pad, H) slab back to HBM once per chunk.
        out_ref[lt] = h_new.astype(out_ref.dtype)

        if needs_mask:
            # Padded timesteps (beyond the real sequence) must not update the
            # recurrent state; their output rows are sliced off in the wrapper.
            valid = (chunk * t_block + lt) < seq_len
            h_new = jnp.where(valid, h_new, h)
            c_new = jnp.where(valid, c_new, c)
        return h_new, c_new

    h_fin, c_fin = lax.fori_loop(0, t_block, step, (h_sc[...], c_sc[...]),
                                 unroll=True)
    h_sc[...] = h_fin
    c_sc[...] = c_fin

    @pl.when(chunk == pl.num_programs(0) - 1)
    def _():
        hn_ref[...] = h_fin.astype(hn_ref.dtype)
        cn_ref[...] = c_fin.astype(cn_ref.dtype)


def chirp_lstm_forward(p, hidden_state, cell_state, w_ih, w_hh, b_ih, b_hh,
                       *, t_block=32, matmul_dtype=jnp.float32):
    """Pallas forward pass of a 1-layer LSTM with input_size=1 (ChirpLSTM).

    p:            (seq, batch, 1)    float32
    hidden_state: (1, batch, hidden) float32
    cell_state:   (1, batch, hidden) float32
    w_ih:         (4*hidden, 1)      float32   (PyTorch weight_ih_l0)
    w_hh:         (4*hidden, hidden) float32   (PyTorch weight_hh_l0)
    b_ih, b_hh:   (4*hidden,)        float32
    matmul_dtype: dtype for the recurrent matmul operands (use jnp.bfloat16 on
                  v6e/v7x for MXU-native passes; state/accumulation stay f32).
    Returns (lstm_out, (h_n, c_n)) exactly like the PyTorch module.
    """
    seq, batch, in_size = p.shape
    assert in_size == 1, "ChirpLSTM uses nn.LSTM(input_size=1)"
    hidden = hidden_state.shape[-1]
    G = 4 * hidden

    # ---- layout glue (plain JAX, off the serial critical path) --------------
    b_pad = ((batch + 7) // 8) * 8            # pad batch to the f32 sublane count
    t_block = max(1, min(t_block, seq))       # timesteps per grid step (chunk)
    num_chunks = (seq + t_block - 1) // t_block
    s_pad = num_chunks * t_block

    # Precompute the input projection + bias for every timestep:
    #   pre[t] = x_t @ W_ih^T + (b_ih + b_hh)   -> (seq, batch, 4H), lane-dense 4H.
    pre = (p.reshape(seq, batch, 1).astype(jnp.float32)
           * w_ih.reshape(1, 1, G).astype(jnp.float32)
           + (b_ih + b_hh).reshape(1, 1, G).astype(jnp.float32))
    pre = jnp.pad(pre, ((0, s_pad - seq), (0, b_pad - batch), (0, 0)))

    h0 = jnp.pad(hidden_state[0], ((0, b_pad - batch), (0, 0)))
    c0 = jnp.pad(cell_state[0], ((0, b_pad - batch), (0, 0)))

    w_hh_t = w_hh.T.astype(matmul_dtype)      # (H, 4H); bf16 cuts MXU passes on v6e/v7x

    kernel = functools.partial(
        _lstm_kernel, hidden=hidden, t_block=t_block, seq_len=seq,
        needs_mask=(s_pad != seq))

    out_shapes = (
        jax.ShapeDtypeStruct((s_pad, b_pad, hidden), p.dtype),   # lstm_out (padded)
        jax.ShapeDtypeStruct((b_pad, hidden), p.dtype),          # h_n
        jax.ShapeDtypeStruct((b_pad, hidden), p.dtype),          # c_n
    )

    grid_spec = pltpu.PrefetchScalarGridSpec(
        num_scalar_prefetch=0,
        grid=(num_chunks,),
        in_specs=[
            pl.BlockSpec((b_pad, hidden), lambda c: (0, 0)),          # h0
            pl.BlockSpec((b_pad, hidden), lambda c: (0, 0)),          # c0
            pl.BlockSpec((hidden, G), lambda c: (0, 0)),              # W_hh^T (resident)
            pl.BlockSpec((t_block, b_pad, G), lambda c: (c, 0, 0)),   # pre chunk
        ],
        out_specs=[
            pl.BlockSpec((t_block, b_pad, hidden), lambda c: (c, 0, 0)),  # out chunk
            pl.BlockSpec((b_pad, hidden), lambda c: (0, 0)),              # h_n (resident)
            pl.BlockSpec((b_pad, hidden), lambda c: (0, 0)),              # c_n (resident)
        ],
        scratch_shapes=[
            pltpu.VMEM((b_pad, hidden), jnp.float32),   # carried h across chunks
            pltpu.VMEM((b_pad, hidden), jnp.float32),   # carried c across chunks
        ],
    )

    lstm_out_p, hn_p, cn_p = pl.pallas_call(
        kernel,
        out_shape=out_shapes,
        grid_spec=grid_spec,
        compiler_params=pltpu.CompilerParams(
            dimension_semantics=("arbitrary",),   # time recurrence is sequential
            # Explicit VMEM budget: resident W_hh + bias-fused pre chunks (double-
            # buffered) + out chunks + state scratch stay far below v7x's 64 MiB.
            vmem_limit_bytes=32 * 1024 * 1024,
        ),
    )(h0, c0, w_hh_t, pre)

    lstm_out = lstm_out_p[:seq, :batch]
    h_n = hn_p[None, :batch, :]
    c_n = cn_p[None, :batch, :]
    return lstm_out, (h_n, c_n)


def _lstm_reference(p, h0, c0, w_ih, w_hh, b_ih, b_hh):
    """Pure-JAX reference matching torch.nn.LSTM semantics (1 layer)."""
    hidden = h0.shape[-1]

    def step(carry, x_t):
        h, c = carry
        gates = x_t @ w_ih.T + h @ w_hh.T + b_ih + b_hh
        i = jax.nn.sigmoid(gates[:, 0 * hidden:1 * hidden])
        f = jax.nn.sigmoid(gates[:, 1 * hidden:2 * hidden])
        g = jnp.tanh(gates[:, 2 * hidden:3 * hidden])
        o = jax.nn.sigmoid(gates[:, 3 * hidden:4 * hidden])
        c_new = f * c + i * g
        h_new = o * jnp.tanh(c_new)
        return (h_new, c_new), h_new

    (h_n, c_n), out = jax.lax.scan(step, (h0[0], c0[0]), p)
    return out, (h_n[None], c_n[None])


if __name__ == "__main__":
    SEQ = 8
    BATCH = 2
    HIDDEN = 32     # module's hidden_size parameter (default 1; use 32 here)
    INPUT = 1       # fixed by nn.LSTM(input_size=1)

    key = jax.random.PRNGKey(0)
    kp, kh, kc, k1, k2, k3, k4 = jax.random.split(key, 7)

    p = jax.random.normal(kp, (SEQ, BATCH, INPUT), dtype=jnp.float32)
    h0 = jax.random.normal(kh, (1, BATCH, HIDDEN), dtype=jnp.float32)
    c0 = jax.random.normal(kc, (1, BATCH, HIDDEN), dtype=jnp.float32)

    # Deterministic parameter init, PyTorch-style U(-1/sqrt(H), 1/sqrt(H)).
    bound = 1.0 / np.sqrt(HIDDEN)
    w_ih = jax.random.uniform(k1, (4 * HIDDEN, INPUT), jnp.float32, -bound, bound)
    w_hh = jax.random.uniform(k2, (4 * HIDDEN, HIDDEN), jnp.float32, -bound, bound)
    b_ih = jax.random.uniform(k3, (4 * HIDDEN,), jnp.float32, -bound, bound)
    b_hh = jax.random.uniform(k4, (4 * HIDDEN,), jnp.float32, -bound, bound)

    ref_out, (ref_hn, ref_cn) = _lstm_reference(p, h0, c0, w_ih, w_hh, b_ih, b_hh)

    # Full-precision path (default): tight tolerance vs. the f32 reference.
    lstm_out, (h_n, c_n) = chirp_lstm_forward(p, h0, c0, w_ih, w_hh, b_ih, b_hh)
    jax.block_until_ready((lstm_out, h_n, c_n))
    np.testing.assert_allclose(np.asarray(lstm_out), np.asarray(ref_out), rtol=1e-5, atol=1e-5)
    np.testing.assert_allclose(np.asarray(h_n), np.asarray(ref_hn), rtol=1e-5, atol=1e-5)
    np.testing.assert_allclose(np.asarray(c_n), np.asarray(ref_cn), rtol=1e-5, atol=1e-5)

    # bf16 recurrent-matmul path (MXU-native on v6e/v7x); state stays f32.
    lstm_out_b, (h_n_b, c_n_b) = chirp_lstm_forward(
        p, h0, c0, w_ih, w_hh, b_ih, b_hh, matmul_dtype=jnp.bfloat16)
    jax.block_until_ready((lstm_out_b, h_n_b, c_n_b))
    np.testing.assert_allclose(np.asarray(lstm_out_b), np.asarray(ref_out), rtol=5e-2, atol=5e-2)
    np.testing.assert_allclose(np.asarray(h_n_b), np.asarray(ref_hn), rtol=5e-2, atol=5e-2)
    np.testing.assert_allclose(np.asarray(c_n_b), np.asarray(ref_cn), rtol=5e-2, atol=5e-2)

    print("KERNEL_OK")
</pallas_src>

<mosaic_0001>
module attributes {stable_mosaic.version = 11 : i64} {
  func.func @_lstm_kernel(%arg0: i32, %arg1: memref<8x32xf32, #tpu.memory_space<vmem>>, %arg2: memref<8x32xf32, #tpu.memory_space<vmem>>, %arg3: memref<32x128xf32, #tpu.memory_space<vmem>>, %arg4: memref<8x8x128xf32, #tpu.memory_space<vmem>>, %arg5: memref<8x8x32xf32, #tpu.memory_space<vmem>>, %arg6: memref<8x32xf32, #tpu.memory_space<vmem>>, %arg7: memref<8x32xf32, #tpu.memory_space<vmem>>, %arg8: memref<8x32xf32, #tpu.memory_space<vmem>>, %arg9: memref<8x32xf32, #tpu.memory_space<vmem>>) attributes {dimension_semantics = [#tpu.dimension_semantics<arbitrary>], iteration_bounds = array<i64: 1>, scalar_prefetch = 0 : i64, scratch_operands = 2 : i64, tpu.core_type = #tpu.core_type<tc>, window_params = [{pipeline_mode = #tpu.pipeline_mode<synchronous>, transform_indices = @transform_0, window_bounds = array<i64: 8, 32>}, {pipeline_mode = #tpu.pipeline_mode<synchronous>, transform_indices = @transform_1, window_bounds = array<i64: 8, 32>}, {pipeline_mode = #tpu.pipeline_mode<synchronous>, transform_indices = @transform_2, window_bounds = array<i64: 32, 128>}, {transform_indices = @transform_3, window_bounds = array<i64: 8, 8, 128>}, {transform_indices = @transform_4, window_bounds = array<i64: 8, 8, 32>}, {pipeline_mode = #tpu.pipeline_mode<synchronous>, transform_indices = @transform_5, window_bounds = array<i64: 8, 32>}, {pipeline_mode = #tpu.pipeline_mode<synchronous>, transform_indices = @transform_6, window_bounds = array<i64: 8, 32>}]} {
    %c0_i32 = arith.constant 0 : i32
    %0 = arith.cmpi eq, %arg0, %c0_i32 : i32
    %1 = arith.extui %0 : i1 to i32
    %c0_i32_0 = arith.constant 0 : i32
    %2 = arith.cmpi ne, %1, %c0_i32_0 : i32
    scf.if %2 {
      %c0_60 = arith.constant 0 : index
      %c0_61 = arith.constant 0 : index
      %203 = vector.load %arg1[%c0_60, %c0_61] : memref<8x32xf32, #tpu.memory_space<vmem>>, vector<8x32xf32>
      %c0_62 = arith.constant 0 : index
      %c0_63 = arith.constant 0 : index
      %204 = vector.load %arg8[%c0_62, %c0_63] : memref<8x32xf32, #tpu.memory_space<vmem>>, vector<8x32xf32>
      tpu.vector_store %arg8[%c0_62, %c0_63], %203 {strides = array<i32>} : memref<8x32xf32, #tpu.memory_space<vmem>>, vector<8x32xf32>,
      %c0_64 = arith.constant 0 : index
      %c0_65 = arith.constant 0 : index
      %205 = vector.load %arg2[%c0_64, %c0_65] : memref<8x32xf32, #tpu.memory_space<vmem>>, vector<8x32xf32>
      %c0_66 = arith.constant 0 : index
      %c0_67 = arith.constant 0 : index
      %206 = vector.load %arg9[%c0_66, %c0_67] : memref<8x32xf32, #tpu.memory_space<vmem>>, vector<8x32xf32>
      tpu.vector_store %arg9[%c0_66, %c0_67], %205 {strides = array<i32>} : memref<8x32xf32, #tpu.memory_space<vmem>>, vector<8x32xf32>,
    } else {
    }
    %c0 = arith.constant 0 : index
    %c0_1 = arith.constant 0 : index
    %3 = vector.load %arg3[%c0, %c0_1] : memref<32x128xf32, #tpu.memory_space<vmem>>, vector<32x128xf32>
    %c0_2 = arith.constant 0 : index
    %c0_3 = arith.constant 0 : index
    %4 = vector.load %arg8[%c0_2, %c0_3] : memref<8x32xf32, #tpu.memory_space<vmem>>, vector<8x32xf32>
    %c0_4 = arith.constant 0 : index
    %c0_5 = arith.constant 0 : index
    %5 = vector.load %arg9[%c0_4, %c0_5] : memref<8x32xf32, #tpu.memory_space<vmem>>, vector<8x32xf32>
    %c0_i32_6 = arith.constant 0 : i32
    %6 = arith.index_cast %c0_i32_6 : i32 to index
    %c0_7 = arith.constant 0 : index
    %c0_8 = arith.constant 0 : index
    %7 = vector.load %arg4[%6, %c0_7, %c0_8] : memref<8x8x128xf32, #tpu.memory_space<vmem>>, vector<1x8x128xf32>
    %8 = vector.shape_cast %7 : vector<1x8x128xf32> to vector<8x128xf32>
    %cst = arith.constant dense<0.000000e+00> : vector<8x128xf32>
    %9 = tpu.matmul %4, %3, %cst {dimension_numbers = #tpu.dot_dimension_numbers<[1], [0], [0], [1], [0, 0, 1, 1], [], []>} : vector<8x32xf32>, vector<32x128xf32>, vector<8x128xf32> -> vector<8x128xf32>
    %10 = arith.addf %8, %9 : vector<8x128xf32>
    %11 = arith.negf %10 : vector<8x128xf32>
    %12 = math.exp %11 : vector<8x128xf32>
    %cst_9 = arith.constant 1.000000e+00 : f32
    %13 = vector.broadcast %cst_9 : f32 to vector<8x128xf32>
    %14 = arith.addf %13, %12 : vector<8x128xf32>
    %15 = arith.divf %13, %14 : vector<8x128xf32>
    %16 = math.tanh %10 : vector<8x128xf32>
    %17 = vector.extract_strided_slice %15 {offsets = [0, 0], sizes = [8, 32], strides = [1, 1]} : vector<8x128xf32> to vector<8x32xf32>
    %18 = vector.extract_strided_slice %15 {offsets = [0, 32], sizes = [8, 32], strides = [1, 1]} : vector<8x128xf32> to vector<8x32xf32>
    %19 = vector.extract_strided_slice %16 {offsets = [0, 64], sizes = [8, 32], strides = [1, 1]} : vector<8x128xf32> to vector<8x32xf32>
    %20 = vector.extract_strided_slice %15 {offsets = [0, 96], sizes = [8, 32], strides = [1, 1]} : vector<8x128xf32> to vector<8x32xf32>
    %21 = arith.mulf %18, %5 : vector<8x32xf32>
    %22 = arith.mulf %17, %19 : vector<8x32xf32>
    %23 = arith.addf %21, %22 : vector<8x32xf32>
    %24 = math.tanh %23 : vector<8x32xf32>
    %25 = arith.mulf %20, %24 : vector<8x32xf32>
    %26 = arith.index_cast %c0_i32_6 : i32 to index
    %c0_10 = arith.constant 0 : index
    %c0_11 = arith.constant 0 : index
    %27 = vector.load %arg5[%26, %c0_10, %c0_11] : memref<8x8x32xf32, #tpu.memory_space<vmem>>, vector<1x8x32xf32>
    %28 = vector.shape_cast %27 : vector<1x8x32xf32> to vector<8x32xf32>
    %29 = vector.shape_cast %25 : vector<8x32xf32> to vector<1x8x32xf32>
    tpu.vector_store %arg5[%26, %c0_10, %c0_11], %29 {strides = array<i32>} : memref<8x8x32xf32, #tpu.memory_space<vmem>>, vector<1x8x32xf32>,
    %c1_i32 = arith.constant 1 : i32
    %30 = arith.index_cast %c1_i32 : i32 to index
    %c0_12 = arith.constant 0 : index
    %c0_13 = arith.constant 0 : index
    %31 = vector.load %arg4[%30, %c0_12, %c0_13] : memref<8x8x128xf32, #tpu.memory_space<vmem>>, vector<1x8x128xf32>
    %32 = vector.shape_cast %31 : vector<1x8x128xf32> to vector<8x128xf32>
    %cst_14 = arith.constant dense<0.000000e+00> : vector<8x128xf32>
    %33 = tpu.matmul %25, %3, %cst_14 {dimension_numbers = #tpu.dot_dimension_numbers<[1], [0], [0], [1], [0, 0, 1, 1], [], []>} : vector<8x32xf32>, vector<32x128xf32>, vector<8x128xf32> -> vector<8x128xf32>
    %34 = arith.addf %32, %33 : vector<8x128xf32>
    %35 = arith.negf %34 : vector<8x128xf32>
    %36 = math.exp %35 : vector<8x128xf32>
    %cst_15 = arith.constant 1.000000e+00 : f32
    %37 = vector.broadcast %cst_15 : f32 to vector<8x128xf32>
    %38 = arith.addf %37, %36 : vector<8x128xf32>
    %39 = arith.divf %37, %38 : vector<8x128xf32>
    %40 = math.tanh %34 : vector<8x128xf32>
    %41 = vector.extract_strided_slice %39 {offsets = [0, 0], sizes = [8, 32], strides = [1, 1]} : vector<8x128xf32> to vector<8x32xf32>
    %42 = vector.extract_strided_slice %39 {offsets = [0, 32], sizes = [8, 32], strides = [1, 1]} : vector<8x128xf32> to vector<8x32xf32>
    %43 = vector.extract_strided_slice %40 {offsets = [0, 64], sizes = [8, 32], strides = [1, 1]} : vector<8x128xf32> to vector<8x32xf32>
    %44 = vector.extract_strided_slice %39 {offsets = [0, 96], sizes = [8, 32], strides = [1, 1]} : vector<8x128xf32> to vector<8x32xf32>
    %45 = arith.mulf %42, %23 : vector<8x32xf32>
    %46 = arith.mulf %41, %43 : vector<8x32xf32>
    %47 = arith.addf %45, %46 : vector<8x32xf32>
    %48 = math.tanh %47 : vector<8x32xf32>
    %49 = arith.mulf %44, %48 : vector<8x32xf32>
    %50 = arith.index_cast %c1_i32 : i32 to index
    %c0_16 = arith.constant 0 : index
    %c0_17 = arith.constant 0 : index
    %51 = vector.load %arg5[%50, %c0_16, %c0_17] : memref<8x8x32xf32, #tpu.memory_space<vmem>>, vector<1x8x32xf32>
    %52 = vector.shape_cast %51 : vector<1x8x32xf32> to vector<8x32xf32>
    %53 = vector.shape_cast %49 : vector<8x32xf32> to vector<1x8x32xf32>
    tpu.vector_store %arg5[%50, %c0_16, %c0_17], %53 {strides = array<i32>} : memref<8x8x32xf32, #tpu.memory_space<vmem>>, vector<1x8x32xf32>,
    %c2_i32 = arith.constant 2 : i32
    %54 = arith.index_cast %c2_i32 : i32 to index
    %c0_18 = arith.constant 0 : index
    %c0_19 = arith.constant 0 : index
    %55 = vector.load %arg4[%54, %c0_18, %c0_19] : memref<8x8x128xf32, #tpu.memory_space<vmem>>, vector<1x8x128xf32>
    %56 = vector.shape_cast %55 : vector<1x8x128xf32> to vector<8x128xf32>
    %cst_20 = arith.constant dense<0.000000e+00> : vector<8x128xf32>
    %57 = tpu.matmul %49, %3, %cst_20 {dimension_numbers = #tpu.dot_dimension_numbers<[1], [0], [0], [1], [0, 0, 1, 1], [], []>} : vector<8x32xf32>, vector<32x128xf32>, vector<8x128xf32> -> vector<8x128xf32>
    %58 = arith.addf %56, %57 : vector<8x128xf32>
    %59 = arith.negf %58 : vector<8x128xf32>
    %60 = math.exp %59 : vector<8x128xf32>
    %cst_21 = arith.constant 1.000000e+00 : f32
    %61 = vector.broadcast %cst_21 : f32 to vector<8x128xf32>
    %62 = arith.addf %61, %60 : vector<8x128xf32>
    %63 = arith.divf %61, %62 : vector<8x128xf32>
    %64 = math.tanh %58 : vector<8x128xf32>
    %65 = vector.extract_strided_slice %63 {offsets = [0, 0], sizes = [8, 32], strides = [1, 1]} : vector<8x128xf32> to vector<8x32xf32>
    %66 = vector.extract_strided_slice %63 {offsets = [0, 32], sizes = [8, 32], strides = [1, 1]} : vector<8x128xf32> to vector<8x32xf32>
    %67 = vector.extract_strided_slice %64 {offsets = [0, 64], sizes = [8, 32], strides = [1, 1]} : vector<8x128xf32> to vector<8x32xf32>
    %68 = vector.extract_strided_slice %63 {offsets = [0, 96], sizes = [8, 32], strides = [1, 1]} : vector<8x128xf32> to vector<8x32xf32>
    %69 = arith.mulf %66, %47 : vector<8x32xf32>
    %70 = arith.mulf %65, %67 : vector<8x32xf32>
    %71 = arith.addf %69, %70 : vector<8x32xf32>
    %72 = math.tanh %71 : vector<8x32xf32>
    %73 = arith.mulf %68, %72 : vector<8x32xf32>
    %74 = arith.index_cast %c2_i32 : i32 to index
    %c0_22 = arith.constant 0 : index
    %c0_23 = arith.constant 0 : index
    %75 = vector.load %arg5[%74, %c0_22, %c0_23] : memref<8x8x32xf32, #tpu.memory_space<vmem>>, vector<1x8x32xf32>
    %76 = vector.shape_cast %75 : vector<1x8x32xf32> to vector<8x32xf32>
    %77 = vector.shape_cast %73 : vector<8x32xf32> to vector<1x8x32xf32>
    tpu.vector_store %arg5[%74, %c0_22, %c0_23], %77 {strides = array<i32>} : memref<8x8x32xf32, #tpu.memory_space<vmem>>, vector<1x8x32xf32>,
    %c3_i32 = arith.constant 3 : i32
    %78 = arith.index_cast %c3_i32 : i32 to index
    %c0_24 = arith.constant 0 : index
    %c0_25 = arith.constant 0 : index
    %79 = vector.load %arg4[%78, %c0_24, %c0_25] : memref<8x8x128xf32, #tpu.memory_space<vmem>>, vector<1x8x128xf32>
    %80 = vector.shape_cast %79 : vector<1x8x128xf32> to vector<8x128xf32>
    %cst_26 = arith.constant dense<0.000000e+00> : vector<8x128xf32>
    %81 = tpu.matmul %73, %3, %cst_26 {dimension_numbers = #tpu.dot_dimension_numbers<[1], [0], [0], [1], [0, 0, 1, 1], [], []>} : vector<8x32xf32>, vector<32x128xf32>, vector<8x128xf32> -> vector<8x128xf32>
    %82 = arith.addf %80, %81 : vector<8x128xf32>
    %83 = arith.negf %82 : vector<8x128xf32>
    %84 = math.exp %83 : vector<8x128xf32>
    %cst_27 = arith.constant 1.000000e+00 : f32
    %85 = vector.broadcast %cst_27 : f32 to vector<8x128xf32>
    %86 = arith.addf %85, %84 : vector<8x128xf32>
    %87 = arith.divf %85, %86 : vector<8x128xf32>
    %88 = math.tanh %82 : vector<8x128xf32>
    %89 = vector.extract_strided_slice %87 {offsets = [0, 0], sizes = [8, 32], strides = [1, 1]} : vector<8x128xf32> to vector<8x32xf32>
    %90 = vector.extract_strided_slice %87 {offsets = [0, 32], sizes = [8, 32], strides = [1, 1]} : vector<8x128xf32> to vector<8x32xf32>
    %91 = vector.extract_strided_slice %88 {offsets = [0, 64], sizes = [8, 32], strides = [1, 1]} : vector<8x128xf32> to vector<8x32xf32>
    %92 = vector.extract_strided_slice %87 {offsets = [0, 96], sizes = [8, 32], strides = [1, 1]} : vector<8x128xf32> to vector<8x32xf32>
    %93 = arith.mulf %90, %71 : vector<8x32xf32>
    %94 = arith.mulf %89, %91 : vector<8x32xf32>
    %95 = arith.addf %93, %94 : vector<8x32xf32>
    %96 = math.tanh %95 : vector<8x32xf32>
    %97 = arith.mulf %92, %96 : vector<8x32xf32>
    %98 = arith.index_cast %c3_i32 : i32 to index
    %c0_28 = arith.constant 0 : index
    %c0_29 = arith.constant 0 : index
    %99 = vector.load %arg5[%98, %c0_28, %c0_29] : memref<8x8x32xf32, #tpu.memory_space<vmem>>, vector<1x8x32xf32>
    %100 = vector.shape_cast %99 : vector<1x8x32xf32> to vector<8x32xf32>
    %101 = vector.shape_cast %97 : vector<8x32xf32> to vector<1x8x32xf32>
    tpu.vector_store %arg5[%98, %c0_28, %c0_29], %101 {strides = array<i32>} : memref<8x8x32xf32, #tpu.memory_space<vmem>>, vector<1x8x32xf32>,
    %c4_i32 = arith.constant 4 : i32
    %102 = arith.index_cast %c4_i32 : i32 to index
    %c0_30 = arith.constant 0 : index
    %c0_31 = arith.constant 0 : index
    %103 = vector.load %arg4[%102, %c0_30, %c0_31] : memref<8x8x128xf32, #tpu.memory_space<vmem>>, vector<1x8x128xf32>
    %104 = vector.shape_cast %103 : vector<1x8x128xf32> to vector<8x128xf32>
    %cst_32 = arith.constant dense<0.000000e+00> : vector<8x128xf32>
    %105 = tpu.matmul %97, %3, %cst_32 {dimension_numbers = #tpu.dot_dimension_numbers<[1], [0], [0], [1], [0, 0, 1, 1], [], []>} : vector<8x32xf32>, vector<32x128xf32>, vector<8x128xf32> -> vector<8x128xf32>
    %106 = arith.addf %104, %105 : vector<8x128xf32>
    %107 = arith.negf %106 : vector<8x128xf32>
    %108 = math.exp %107 : vector<8x128xf32>
    %cst_33 = arith.constant 1.000000e+00 : f32
    %109 = vector.broadcast %cst_33 : f32 to vector<8x128xf32>
    %110 = arith.addf %109, %108 : vector<8x128xf32>
    %111 = arith.divf %109, %110 : vector<8x128xf32>
    %112 = math.tanh %106 : vector<8x128xf32>
    %113 = vector.extract_strided_slice %111 {offsets = [0, 0], sizes = [8, 32], strides = [1, 1]} : vector<8x128xf32> to vector<8x32xf32>
    %114 = vector.extract_strided_slice %111 {offsets = [0, 32], sizes = [8, 32], strides = [1, 1]} : vector<8x128xf32> to vector<8x32xf32>
    %115 = vector.extract_strided_slice %112 {offsets = [0, 64], sizes = [8, 32], strides = [1, 1]} : vector<8x128xf32> to vector<8x32xf32>
    %116 = vector.extract_strided_slice %111 {offsets = [0, 96], sizes = [8, 32], strides = [1, 1]} : vector<8x128xf32> to vector<8x32xf32>
    %117 = arith.mulf %114, %95 : vector<8x32xf32>
    %118 = arith.mulf %113, %115 : vector<8x32xf32>
    %119 = arith.addf %117, %118 : vector<8x32xf32>
    %120 = math.tanh %119 : vector<8x32xf32>
    %121 = arith.mulf %116, %120 : vector<8x32xf32>
    %122 = arith.index_cast %c4_i32 : i32 to index
    %c0_34 = arith.constant 0 : index
    %c0_35 = arith.constant 0 : index
    %123 = vector.load %arg5[%122, %c0_34, %c0_35] : memref<8x8x32xf32, #tpu.memory_space<vmem>>, vector<1x8x32xf32>
    %124 = vector.shape_cast %123 : vector<1x8x32xf32> to vector<8x32xf32>
    %125 = vector.shape_cast %121 : vector<8x32xf32> to vector<1x8x32xf32>
    tpu.vector_store %arg5[%122, %c0_34, %c0_35], %125 {strides = array<i32>} : memref<8x8x32xf32, #tpu.memory_space<vmem>>, vector<1x8x32xf32>,
    %c5_i32 = arith.constant 5 : i32
    %126 = arith.index_cast %c5_i32 : i32 to index
    %c0_36 = arith.constant 0 : index
    %c0_37 = arith.constant 0 : index
    %127 = vector.load %arg4[%126, %c0_36, %c0_37] : memref<8x8x128xf32, #tpu.memory_space<vmem>>, vector<1x8x128xf32>
    %128 = vector.shape_cast %127 : vector<1x8x128xf32> to vector<8x128xf32>
    %cst_38 = arith.constant dense<0.000000e+00> : vector<8x128xf32>
    %129 = tpu.matmul %121, %3, %cst_38 {dimension_numbers = #tpu.dot_dimension_numbers<[1], [0], [0], [1], [0, 0, 1, 1], [], []>} : vector<8x32xf32>, vector<32x128xf32>, vector<8x128xf32> -> vector<8x128xf32>
    %130 = arith.addf %128, %129 : vector<8x128xf32>
    %131 = arith.negf %130 : vector<8x128xf32>
    %132 = math.exp %131 : vector<8x128xf32>
    %cst_39 = arith.constant 1.000000e+00 : f32
    %133 = vector.broadcast %cst_39 : f32 to vector<8x128xf32>
    %134 = arith.addf %133, %132 : vector<8x128xf32>
    %135 = arith.divf %133, %134 : vector<8x128xf32>
    %136 = math.tanh %130 : vector<8x128xf32>
    %137 = vector.extract_strided_slice %135 {offsets = [0, 0], sizes = [8, 32], strides = [1, 1]} : vector<8x128xf32> to vector<8x32xf32>
    %138 = vector.extract_strided_slice %135 {offsets = [0, 32], sizes = [8, 32], strides = [1, 1]} : vector<8x128xf32> to vector<8x32xf32>
    %139 = vector.extract_strided_slice %136 {offsets = [0, 64], sizes = [8, 32], strides = [1, 1]} : vector<8x128xf32> to vector<8x32xf32>
    %140 = vector.extract_strided_slice %135 {offsets = [0, 96], sizes = [8, 32], strides = [1, 1]} : vector<8x128xf32> to vector<8x32xf32>
    %141 = arith.mulf %138, %119 : vector<8x32xf32>
    %142 = arith.mulf %137, %139 : vector<8x32xf32>
    %143 = arith.addf %141, %142 : vector<8x32xf32>
    %144 = math.tanh %143 : vector<8x32xf32>
    %145 = arith.mulf %140, %144 : vector<8x32xf32>
    %146 = arith.index_cast %c5_i32 : i32 to index
    %c0_40 = arith.constant 0 : index
    %c0_41 = arith.constant 0 : index
    %147 = vector.load %arg5[%146, %c0_40, %c0_41] : memref<8x8x32xf32, #tpu.memory_space<vmem>>, vector<1x8x32xf32>
    %148 = vector.shape_cast %147 : vector<1x8x32xf32> to vector<8x32xf32>
    %149 = vector.shape_cast %145 : vector<8x32xf32> to vector<1x8x32xf32>
    tpu.vector_store %arg5[%146, %c0_40, %c0_41], %149 {strides = array<i32>} : memref<8x8x32xf32, #tpu.memory_space<vmem>>, vector<1x8x32xf32>,
    %c6_i32 = arith.constant 6 : i32
    %150 = arith.index_cast %c6_i32 : i32 to index
    %c0_42 = arith.constant 0 : index
    %c0_43 = arith.constant 0 : index
    %151 = vector.load %arg4[%150, %c0_42, %c0_43] : memref<8x8x128xf32, #tpu.memory_space<vmem>>, vector<1x8x128xf32>
    %152 = vector.shape_cast %151 : vector<1x8x128xf32> to vector<8x128xf32>
    %cst_44 = arith.constant dense<0.000000e+00> : vector<8x128xf32>
    %153 = tpu.matmul %145, %3, %cst_44 {dimension_numbers = #tpu.dot_dimension_numbers<[1], [0], [0], [1], [0, 0, 1, 1], [], []>} : vector<8x32xf32>, vector<32x128xf32>, vector<8x128xf32> -> vector<8x128xf32>
    %154 = arith.addf %152, %153 : vector<8x128xf32>
    %155 = arith.negf %154 : vector<8x128xf32>
    %156 = math.exp %155 : vector<8x128xf32>
    %cst_45 = arith.constant 1.000000e+00 : f32
    %157 = vector.broadcast %cst_45 : f32 to vector<8x128xf32>
    %158 = arith.addf %157, %156 : vector<8x128xf32>
    %159 = arith.divf %157, %158 : vector<8x128xf32>
    %160 = math.tanh %154 : vector<8x128xf32>
    %161 = vector.extract_strided_slice %159 {offsets = [0, 0], sizes = [8, 32], strides = [1, 1]} : vector<8x128xf32> to vector<8x32xf32>
    %162 = vector.extract_strided_slice %159 {offsets = [0, 32], sizes = [8, 32], strides = [1, 1]} : vector<8x128xf32> to vector<8x32xf32>
    %163 = vector.extract_strided_slice %160 {offsets = [0, 64], sizes = [8, 32], strides = [1, 1]} : vector<8x128xf32> to vector<8x32xf32>
    %164 = vector.extract_strided_slice %159 {offsets = [0, 96], sizes = [8, 32], strides = [1, 1]} : vector<8x128xf32> to vector<8x32xf32>
    %165 = arith.mulf %162, %143 : vector<8x32xf32>
    %166 = arith.mulf %161, %163 : vector<8x32xf32>
    %167 = arith.addf %165, %166 : vector<8x32xf32>
    %168 = math.tanh %167 : vector<8x32xf32>
    %169 = arith.mulf %164, %168 : vector<8x32xf32>
    %170 = arith.index_cast %c6_i32 : i32 to index
    %c0_46 = arith.constant 0 : index
    %c0_47 = arith.constant 0 : index
    %171 = vector.load %arg5[%170, %c0_46, %c0_47] : memref<8x8x32xf32, #tpu.memory_space<vmem>>, vector<1x8x32xf32>
    %172 = vector.shape_cast %171 : vector<1x8x32xf32> to vector<8x32xf32>
    %173 = vector.shape_cast %169 : vector<8x32xf32> to vector<1x8x32xf32>
    tpu.vector_store %arg5[%170, %c0_46, %c0_47], %173 {strides = array<i32>} : memref<8x8x32xf32, #tpu.memory_space<vmem>>, vector<1x8x32xf32>,
    %c7_i32 = arith.constant 7 : i32
    %174 = arith.index_cast %c7_i32 : i32 to index
    %c0_48 = arith.constant 0 : index
    %c0_49 = arith.constant 0 : index
    %175 = vector.load %arg4[%174, %c0_48, %c0_49] : memref<8x8x128xf32, #tpu.memory_space<vmem>>, vector<1x8x128xf32>
    %176 = vector.shape_cast %175 : vector<1x8x128xf32> to vector<8x128xf32>
    %cst_50 = arith.constant dense<0.000000e+00> : vector<8x128xf32>
    %177 = tpu.matmul %169, %3, %cst_50 {dimension_numbers = #tpu.dot_dimension_numbers<[1], [0], [0], [1], [0, 0, 1, 1], [], []>} : vector<8x32xf32>, vector<32x128xf32>, vector<8x128xf32> -> vector<8x128xf32>
    %178 = arith.addf %176, %177 : vector<8x128xf32>
    %179 = arith.negf %178 : vector<8x128xf32>
    %180 = math.exp %179 : vector<8x128xf32>
    %cst_51 = arith.constant 1.000000e+00 : f32
    %181 = vector.broadcast %cst_51 : f32 to vector<8x128xf32>
    %182 = arith.addf %181, %180 : vector<8x128xf32>
    %183 = arith.divf %181, %182 : vector<8x128xf32>
    %184 = math.tanh %178 : vector<8x128xf32>
    %185 = vector.extract_strided_slice %183 {offsets = [0, 0], sizes = [8, 32], strides = [1, 1]} : vector<8x128xf32> to vector<8x32xf32>
    %186 = vector.extract_strided_slice %183 {offsets = [0, 32], sizes = [8, 32], strides = [1, 1]} : vector<8x128xf32> to vector<8x32xf32>
    %187 = vector.extract_strided_slice %184 {offsets = [0, 64], sizes = [8, 32], strides = [1, 1]} : vector<8x128xf32> to vector<8x32xf32>
    %188 = vector.extract_strided_slice %183 {offsets = [0, 96], sizes = [8, 32], strides = [1, 1]} : vector<8x128xf32> to vector<8x32xf32>
    %189 = arith.mulf %186, %167 : vector<8x32xf32>
    %190 = arith.mulf %185, %187 : vector<8x32xf32>
    %191 = arith.addf %189, %190 : vector<8x32xf32>
    %192 = math.tanh %191 : vector<8x32xf32>
    %193 = arith.mulf %188, %192 : vector<8x32xf32>
    %194 = arith.index_cast %c7_i32 : i32 to index
    %c0_52 = arith.constant 0 : index
    %c0_53 = arith.constant 0 : index
    %195 = vector.load %arg5[%194, %c0_52, %c0_53] : memref<8x8x32xf32, #tpu.memory_space<vmem>>, vector<1x8x32xf32>
    %196 = vector.shape_cast %195 : vector<1x8x32xf32> to vector<8x32xf32>
    %197 = vector.shape_cast %193 : vector<8x32xf32> to vector<1x8x32xf32>
    tpu.vector_store %arg5[%194, %c0_52, %c0_53], %197 {strides = array<i32>} : memref<8x8x32xf32, #tpu.memory_space<vmem>>, vector<1x8x32xf32>,
    %c8_i32 = arith.constant 8 : i32
    %c0_54 = arith.constant 0 : index
    %c0_55 = arith.constant 0 : index
    %198 = vector.load %arg8[%c0_54, %c0_55] : memref<8x32xf32, #tpu.memory_space<vmem>>, vector<8x32xf32>
    tpu.vector_store %arg8[%c0_54, %c0_55], %193 {strides = array<i32>} : memref<8x32xf32, #tpu.memory_space<vmem>>, vector<8x32xf32>,
    %c0_56 = arith.constant 0 : index
    %c0_57 = arith.constant 0 : index
    %199 = vector.load %arg9[%c0_56, %c0_57] : memref<8x32xf32, #tpu.memory_space<vmem>>, vector<8x32xf32>
    tpu.vector_store %arg9[%c0_56, %c0_57], %191 {strides = array<i32>} : memref<8x32xf32, #tpu.memory_space<vmem>>, vector<8x32xf32>,
    %c0_i32_58 = arith.constant 0 : i32
    %200 = arith.cmpi eq, %arg0, %c0_i32_58 : i32
    %201 = arith.extui %200 : i1 to i32
    %c0_i32_59 = arith.constant 0 : i32
    %202 = arith.cmpi ne, %201, %c0_i32_59 : i32
    scf.if %202 {
      %c0_60 = arith.constant 0 : index
      %c0_61 = arith.constant 0 : index
      %203 = vector.load %arg6[%c0_60, %c0_61] : memref<8x32xf32, #tpu.memory_space<vmem>>, vector<8x32xf32>
      tpu.vector_store %arg6[%c0_60, %c0_61], %193 {strides = array<i32>} : memref<8x32xf32, #tpu.memory_space<vmem>>, vector<8x32xf32>,
      %c0_62 = arith.constant 0 : index
      %c0_63 = arith.constant 0 : index
      %204 = vector.load %arg7[%c0_62, %c0_63] : memref<8x32xf32, #tpu.memory_space<vmem>>, vector<8x32xf32>
      tpu.vector_store %arg7[%c0_62, %c0_63], %191 {strides = array<i32>} : memref<8x32xf32, #tpu.memory_space<vmem>>, vector<8x32xf32>,
    } else {
    }
    return
  }
  func.func @transform_0(%arg0: i32) -> (i32, i32) {
    %c0_i32 = arith.constant 0 : i32
    %c0_i32_0 = arith.constant 0 : i32
    %c0_i32_1 = arith.constant 0 : i32
    return %c0_i32, %c0_i32_0 : i32, i32
  }
  func.func @transform_1(%arg0: i32) -> (i32, i32) {
    %c0_i32 = arith.constant 0 : i32
    %c0_i32_0 = arith.constant 0 : i32
    %c0_i32_1 = arith.constant 0 : i32
    return %c0_i32, %c0_i32_0 : i32, i32
  }
  func.func @transform_2(%arg0: i32) -> (i32, i32) {
    %c0_i32 = arith.constant 0 : i32
    %c0_i32_0 = arith.constant 0 : i32
    %c0_i32_1 = arith.constant 0 : i32
    return %c0_i32, %c0_i32_0 : i32, i32
  }
  func.func @transform_3(%arg0: i32) -> (i32, i32, i32) {
    %c0_i32 = arith.constant 0 : i32
    %c0_i32_0 = arith.constant 0 : i32
    %c0_i32_1 = arith.constant 0 : i32
    return %arg0, %c0_i32, %c0_i32_0 : i32, i32, i32
  }
  func.func @transform_4(%arg0: i32) -> (i32, i32, i32) {
    %c0_i32 = arith.constant 0 : i32
    %c0_i32_0 = arith.constant 0 : i32
    %c0_i32_1 = arith.constant 0 : i32
    return %arg0, %c0_i32, %c0_i32_0 : i32, i32, i32
  }
  func.func @transform_5(%arg0: i32) -> (i32, i32) {
    %c0_i32 = arith.constant 0 : i32
    %c0_i32_0 = arith.constant 0 : i32
    %c0_i32_1 = arith.constant 0 : i32
    return %c0_i32, %c0_i32_0 : i32, i32
  }
  func.func @transform_6(%arg0: i32) -> (i32, i32) {
    %c0_i32 = arith.constant 0 : i32
    %c0_i32_0 = arith.constant 0 : i32
    %c0_i32_1 = arith.constant 0 : i32
    return %c0_i32, %c0_i32_0 : i32, i32
  }
}

</mosaic_0001>

<llo_original>
// kernel: tpu_custom_call.1
$region0: #{tpu_custom_call.1}
  #allocation0 [shape = 'u32[]', space=smem, size = 0x4, offset = 0x4, fixed_abs, tag = 'smem constant byte address 0x4 - core index']
  #allocation1 [shape = 'u32[144,128]{1,0:T(1,128)}', space=vmem, size = 0x12000, scoped, tag = 'internal scratch']
  #allocation2 [shape = 'f32[8,32]{1,0:T(8,128)}', space=vmem, size = 0x1000, scoped, tag = 'scratch operand']
  #allocation3 [shape = 'f32[8,32]{1,0:T(8,128)}', space=vmem, size = 0x1000, scoped, tag = 'scratch operand']
  %s0 = inlined_call_operand.hbm [shape: f32[8,32], index: 0, kind: input, shape index: {}]
  %s1 = inlined_call_operand.hbm [shape: f32[8,32], index: 1, kind: input, shape index: {}]
  %s2 = inlined_call_operand.hbm [shape: f32[32,128], index: 2, kind: input, shape index: {}]
  %s3 = inlined_call_operand.hbm [shape: f32[8,8,128], index: 3, kind: input, shape index: {}]
  %s4 = inlined_call_operand.hbm [shape: f32[8,8,32], index: 4, kind: output, shape index: {0}]
  %s5 = inlined_call_operand.hbm [shape: f32[8,32], index: 5, kind: output, shape index: {1}]
  %s6 = inlined_call_operand.hbm [shape: f32[8,32], index: 6, kind: output, shape index: {2}]
  %7 = xla_tuple %s4, %s5, %s6
  %s8 = sld [smem:[#allocation0]]
  $region66: #{tpu_custom_call.1} parent=0
    _
  %s10 = ssub.s32 1, %s8
  %s11 = scalar_select 0, %s10, %s8
  $region1: #{tpu_custom_call.1} parent=0
    #allocation4 [shape = 'u8[4096]{0}', space=vmem, size = 0x1000, scoped, tag = 'input window, operand 0, single buffered']
    #allocation5 [shape = 's32[1]{0}', space=sflag, size = 0x4, scoped, tag = 'scoped memory for tpu_custom_call.1']
    #allocation6 [shape = 's32[1]{0}', space=sflag, size = 0x4, scoped, tag = 'scoped memory for tpu_custom_call.1']
    #allocation7 [shape = 'u8[4096]{0}', space=vmem, size = 0x1000, scoped, tag = 'input window, operand 1, single buffered']
    #allocation8 [shape = 's32[1]{0}', space=sflag, size = 0x4, scoped, tag = 'scoped memory for tpu_custom_call.1']
    #allocation9 [shape = 'u8[16384]{0}', space=vmem, size = 0x4000, scoped, tag = 'input window, operand 2, single buffered']
    #allocation10 [shape = 'u8[32768]{0}', space=vmem, size = 0x8000, scoped, tag = 'input window, operand 3, single buffered']
    #allocation11 [shape = 's32[1]{0}', space=sflag, size = 0x4, scoped, tag = 'scoped memory for tpu_custom_call.1']
    #allocation12 [shape = 'u8[32768]{0}', space=vmem, size = 0x8000, scoped, tag = 'output window, operand 0, single buffered']
    #allocation13 [shape = 'u8[4096]{0}', space=vmem, size = 0x1000, scoped, tag = 'output window, operand 1, single buffered']
    #allocation14 [shape = 's32[1]{0}', space=sflag, size = 0x4, scoped, tag = 'scoped memory for tpu_custom_call.1']
    #allocation15 [shape = 'u8[4096]{0}', space=vmem, size = 0x1000, scoped, tag = 'output window, operand 2, single buffered']
    %12 = vsyncpa [#allocation5], 0
    %13 = vsyncpa [#allocation8], 0
    %14 = vsyncpa [#allocation11], 0
    %15 = vsyncpa [#allocation6], 0
    %16 = vsyncpa [#allocation14], 0
    // Predicated region
    $region2: #{tpu_custom_call.1} parent=1 // pred_check
      _
    $region3: #{tpu_custom_call.1} parent=1 // pred_check_branch
      %18 = sbr.rel (0) target = $region5
    $region4: #{tpu_custom_call.1} parent=1 // pred_region
      %s20 = ssub.s32 128, 128
      %21 = vsyncadd [#allocation5], %s20
      %s23 = sshll.u32 [#allocation4], 4
      %s24 = int_to_ptr.vmem [resolvable:$true] %s23
      %26 = dma.hbm_to_vmem [thread:$0]  %s0, 128, %s24, [#allocation5]
    $region5: #{tpu_custom_call.1} parent=1 // pred_fallthru
      _
    // Predicated region
    $region6: #{tpu_custom_call.1} parent=1 // pred_check
      _
    $region7: #{tpu_custom_call.1} parent=1 // pred_check_branch
      %28 = sbr.rel (0) target = $region9
    $region8: #{tpu_custom_call.1} parent=1 // pred_region
      %s30 = ssub.s32 128, 128
      %31 = vsyncadd [#allocation8], %s30
      %s33 = sshll.u32 [#allocation7], 4
      %s34 = int_to_ptr.vmem [resolvable:$true] %s33
      %36 = dma.hbm_to_vmem [thread:$0]  %s1, 128, %s34, [#allocation8]
    $region9: #{tpu_custom_call.1} parent=1 // pred_fallthru
      _
    // Predicated region
    $region10: #{tpu_custom_call.1} parent=1 // pred_check
      _
    $region11: #{tpu_custom_call.1} parent=1 // pred_check_branch
      %38 = sbr.rel (0) target = $region13
    $region12: #{tpu_custom_call.1} parent=1 // pred_region
      %s40 = ssub.s32 512, 512
      %41 = vsyncadd [#allocation8], %s40
      %s42 = sshll.u32 [#allocation9], 4
      %s43 = int_to_ptr.vmem [resolvable:$true] %s42
      %48 = dma.hbm_to_vmem [thread:$0]  %s2, 512, %s43, [#allocation8], 128, 128, 8
    $region13: #{tpu_custom_call.1} parent=1 // pred_fallthru
      _
    // Predicated region
    $region14: #{tpu_custom_call.1} parent=1 // pred_check
      _
    $region15: #{tpu_custom_call.1} parent=1 // pred_check_branch
      %50 = sbr.rel (0) target = $region17
    $region16: #{tpu_custom_call.1} parent=1 // pred_region
      %s52 = ssub.s32 1024, 1024
      %53 = vsyncadd [#allocation11], %s52
      %s54 = sshll.u32 [#allocation10], 4
      %s55 = int_to_ptr.vmem [resolvable:$true] %s54
      %60 = dma.hbm_to_vmem [thread:$0]  %s3, 1024, %s55, [#allocation11], 128, 128, 8
    $region17: #{tpu_custom_call.1} parent=1 // pred_fallthru
      _
    // Predicated region
    $region18: #{tpu_custom_call.1} parent=1 // pred_check
      _
    $region19: #{tpu_custom_call.1} parent=1 // pred_check_branch
      %62 = sbr.rel (0) target = $region21
    $region20: #{tpu_custom_call.1} parent=1 // pred_region
      %63 = dma.done [#allocation5], 128
    $region21: #{tpu_custom_call.1} parent=1 // pred_fallthru
      _
    // Predicated region
    $region22: #{tpu_custom_call.1} parent=1 // pred_check
      _
    $region23: #{tpu_custom_call.1} parent=1 // pred_check_branch
      %65 = sbr.rel (0) target = $region25
    $region24: #{tpu_custom_call.1} parent=1 // pred_region
      %66 = dma.done [#allocation8], 128
    $region25: #{tpu_custom_call.1} parent=1 // pred_fallthru
      _
    // Predicated region
    $region26: #{tpu_custom_call.1} parent=1 // pred_check
      _
    $region27: #{tpu_custom_call.1} parent=1 // pred_check_branch
      %68 = sbr.rel (0) target = $region29
    $region28: #{tpu_custom_call.1} parent=1 // pred_region
      %69 = dma.done [#allocation8], 512
    $region29: #{tpu_custom_call.1} parent=1 // pred_fallthru
      _
    // Predicated region
    $region30: #{tpu_custom_call.1} parent=1 // pred_check
      _
    $region31: #{tpu_custom_call.1} parent=1 // pred_check_branch
      %71 = sbr.rel (0) target = $region33
    $region32: #{tpu_custom_call.1} parent=1 // pred_region
      %72 = dma.done [#allocation11], 1024
    $region33: #{tpu_custom_call.1} parent=1 // pred_fallthru
      _
    %p73 = scmp.eq.s32.totalorder 0, 0
    // Predicated region
    $region34: #{tpu_custom_call.1} parent=1 // pred_check
      %p74 = pneg %p73
    $region35: #{tpu_custom_call.1} parent=1 // pred_check_branch
      %76 = sbr.rel (%p74) target = $region37
    $region36: #{tpu_custom_call.1} parent=1 // pred_region
      %v77 = vld [vmem:[#allocation4] sm:$0xff]
      %vm78 = vcmask 261120
      %79 = vst.msk [vmem:[#allocation2] sm:$0xff] %vm78, %v77
      %v80 = vld [vmem:[#allocation7] sm:$0xff]
      %81 = vst.msk [vmem:[#allocation3] sm:$0xff] %vm78, %v80
    $region37: #{tpu_custom_call.1} parent=1 // pred_fallthru
      _
    %v82 = vld [vmem:[#allocation9] sm:$0xff]
    %v83 = vld [vmem:[#allocation9 + $0x8] sm:$0xff]
    %v84 = vld [vmem:[#allocation9 + $0x10] sm:$0xff]
    %v85 = vld [vmem:[#allocation9 + $0x18] sm:$0xff]
    %v86 = vld [vmem:[#allocation2] sm:$0xff]
    %v87 = vld [vmem:[#allocation3] sm:$0xff]
    %v88 = vld [vmem:[#allocation10] sm:$0xff]
    %vm89 = vcmask 261120
    %v91 = vsel %vm89, %v86, 0
    %93 = vmatprep.subr.mxu0 0.0
    %94 = vmatpush1.msra.mxu0 0.0
    %95 = vmatprep.subr.mxu0 0.0
    %96 = vmatpush1.msra.mxu0 0.0
    %97 = vmatprep.subr.mxu0 0.0
    %98 = vmatpush1.msra.mxu0 0.0
    %99 = vmatprep.subr.mxu0 0.0
    %100 = vmatpush1.msra.mxu0 0.0
    %101 = vmatprep.subr.mxu0 0.0
    %102 = vmatpush1.msra.mxu0 0.0
    %103 = vmatprep.subr.mxu0 0.0
    %104 = vmatpush1.msra.mxu0 0.0
    %105 = vmatprep.subr.mxu0 0.0
    %106 = vmatpush1.msra.mxu0 0.0
    %107 = vmatprep.subr.mxu0 0.0
    %108 = vmatpush1.msra.mxu0 0.0
    %109 = vmatprep.subr.mxu0 0.0
    %110 = vmatpush1.msra.mxu0 0.0
    %111 = vmatprep.subr.mxu0 0.0
    %112 = vmatpush1.msra.mxu0 0.0
    %113 = vmatprep.subr.mxu0 0.0
    %114 = vmatpush1.msra.mxu0 0.0
    %115 = vmatprep.subr.mxu0 0.0
    %116 = vmatpush1.msra.mxu0 0.0
    %117 = vmatprep.subr.mxu0 0.0
    %118 = vmatpush1.msra.mxu0 %v85
    %119 = vmatprep.subr.mxu0 0.0
    %120 = vmatpush1.msra.mxu0 %v84
    %121 = vmatprep.subr.mxu0 0.0
    %122 = vmatpush1.msra.mxu0 %v83
    %123 = vmatprep.subr.mxu0 0.0
    %124 = vmatpush1.msra.mxu0 %v82
    %125 = vmatprep.subr.mxu0 0.0
    %126 = vmatpush2.msra.mxu0 0.0
    %127 = vmatprep.subr.mxu0 0.0
    %128 = vmatpush2.msra.mxu0 0.0
    %129 = vmatprep.subr.mxu0 0.0
    %130 = vmatpush2.msra.mxu0 0.0
    %131 = vmatprep.subr.mxu0 0.0
    %132 = vmatpush2.msra.mxu0 0.0
    %133 = vmatprep.subr.mxu0 0.0
    %134 = vmatpush2.msra.mxu0 0.0
    %135 = vmatprep.subr.mxu0 0.0
    %136 = vmatpush2.msra.mxu0 0.0
    %137 = vmatprep.subr.mxu0 0.0
    %138 = vmatpush2.msra.mxu0 0.0
    %139 = vmatprep.subr.mxu0 0.0
    %140 = vmatpush2.msra.mxu0 0.0
    %141 = vmatprep.subr.mxu0 0.0
    %142 = vmatpush2.msra.mxu0 0.0
    %143 = vmatprep.subr.mxu0 0.0
    %144 = vmatpush2.msra.mxu0 0.0
    %145 = vmatprep.subr.mxu0 0.0
    %146 = vmatpush2.msra.mxu0 0.0
    %147 = vmatprep.subr.mxu0 0.0
    %148 = vmatpush2.msra.mxu0 0.0
    %149 = vmatprep.subr.mxu0 0.0
    %150 = vmatpush2.msra.mxu0 0.0
    %151 = vmatprep.subr.mxu0 0.0
    %152 = vmatpush2.msra.mxu0 0.0
    %153 = vmatprep.subr.mxu0 0.0
    %154 = vmatpush2.msra.mxu0 0.0
    %155 = vmatprep.subr.mxu0 0.0
    %156 = vmatpush2.msra.mxu0 0.0
    %157 = vmatprep.mubr.f32.mxu0 0.0
    %158 = vmatmul.mubr.f32.gmra.mxu0 %v91
    %v159 = vpop.f32.mrf.mxu0
    %v160 = vadd.f32 0.0, %v159
    %v161 = vpop.f32.mrf.mxu0
    %162 = vdwg.mxu0
    %v163 = vadd.f32 %v88, %v160
    %v164 = vxor.u32 %v163, 2147483648
    %v165 = vmul.f32 %v164, 1.442695
    %v166 = vpow.pop %v165
    %v167 = vadd.f32 %v166, 1.0
    %v168 = vrcp.pop %v167
    %v169 = vmul.f32 1.0, %v168
    %v170 = vtanh.pop %v163
    %172 = vrot.lane.b32.xlu0 %v87, 32
    %v173 = vpop.permute.xlu0 %172
    %v175 = vmul.f32 %v169, %v173
    %177 = vrot.lane.b32.xlu0 %v170, 64
    %v178 = vpop.permute.xlu0 %177
    %v180 = vmul.f32 %v169, %v178
    %182 = vrot.lane.b32.xlu0 %v180, 32
    %v183 = vpop.permute.xlu0 %182
    %v185 = vadd.f32 %v175, %v183
    %v186 = vtanh.pop %v185
    %188 = vrot.lane.b32.xlu0 %v186, 64
    %v189 = vpop.permute.xlu0 %188
    %v191 = vmul.f32 %v169, %v189
    %193 = vrot.lane.b32.xlu0 %v191, 32
    %v194 = vpop.permute.xlu0 %193
    %196 = vst.msk [vmem:[#allocation12] sm:$0xff] %vm89, %v194
    %s197 = scalar_lea.vmem [#allocation10], 8
    %v198 = vld [vmem:[%s197] sm:$0xff]
    %v199 = vsel %vm89, %v194, 0
    %201 = vmatprep.subr.mxu0 0.0
    %202 = vmatpush1.msra.mxu0 0.0
    %203 = vmatprep.subr.mxu0 0.0
    %204 = vmatpush1.msra.mxu0 0.0
    %205 = vmatprep.subr.mxu0 0.0
    %206 = vmatpush1.msra.mxu0 0.0
    %207 = vmatprep.subr.mxu0 0.0
    %208 = vmatpush1.msra.mxu0 0.0
    %209 = vmatprep.subr.mxu0 0.0
    %210 = vmatpush1.msra.mxu0 0.0
    %211 = vmatprep.subr.mxu0 0.0
    %212 = vmatpush1.msra.mxu0 0.0
    %213 = vmatprep.subr.mxu0 0.0
    %214 = vmatpush1.msra.mxu0 0.0
    %215 = vmatprep.subr.mxu0 0.0
    %216 = vmatpush1.msra.mxu0 0.0
    %217 = vmatprep.subr.mxu0 0.0
    %218 = vmatpush1.msra.mxu0 0.0
    %219 = vmatprep.subr.mxu0 0.0
    %220 = vmatpush1.msra.mxu0 0.0
    %221 = vmatprep.subr.mxu0 0.0
    %222 = vmatpush1.msra.mxu0 0.0
    %223 = vmatprep.subr.mxu0 0.0
    %224 = vmatpush1.msra.mxu0 0.0
    %225 = vmatprep.subr.mxu0 0.0
    %226 = vmatpush1.msra.mxu0 %v85
    %227 = vmatprep.subr.mxu0 0.0
    %228 = vmatpush1.msra.mxu0 %v84
    %229 = vmatprep.subr.mxu0 0.0
    %230 = vmatpush1.msra.mxu0 %v83
    %231 = vmatprep.subr.mxu0 0.0
    %232 = vmatpush1.msra.mxu0 %v82
    %233 = vmatprep.subr.mxu0 0.0
    %234 = vmatpush2.msra.mxu0 0.0
    %235 = vmatprep.subr.mxu0 0.0
    %236 = vmatpush2.msra.mxu0 0.0
    %237 = vmatprep.subr.mxu0 0.0
    %238 = vmatpush2.msra.mxu0 0.0
    %239 = vmatprep.subr.mxu0 0.0
    %240 = vmatpush2.msra.mxu0 0.0
    %241 = vmatprep.subr.mxu0 0.0
    %242 = vmatpush2.msra.mxu0 0.0
    %243 = vmatprep.subr.mxu0 0.0
    %244 = vmatpush2.msra.mxu0 0.0
    %245 = vmatprep.subr.mxu0 0.0
    %246 = vmatpush2.msra.mxu0 0.0
    %247 = vmatprep.subr.mxu0 0.0
    %248 = vmatpush2.msra.mxu0 0.0
    %249 = vmatprep.subr.mxu0 0.0
    %250 = vmatpush2.msra.mxu0 0.0
    %251 = vmatprep.subr.mxu0 0.0
    %252 = vmatpush2.msra.mxu0 0.0
    %253 = vmatprep.subr.mxu0 0.0
    %254 = vmatpush2.msra.mxu0 0.0
    %255 = vmatprep.subr.mxu0 0.0
    %256 = vmatpush2.msra.mxu0 0.0
    %257 = vmatprep.subr.mxu0 0.0
    %258 = vmatpush2.msra.mxu0 0.0
    %259 = vmatprep.subr.mxu0 0.0
    %260 = vmatpush2.msra.mxu0 0.0
    %261 = vmatprep.subr.mxu0 0.0
    %262 = vmatpush2.msra.mxu0 0.0
    %263 = vmatprep.subr.mxu0 0.0
    %264 = vmatpush2.msra.mxu0 0.0
    %265 = vmatprep.mubr.f32.mxu0 0.0
    %266 = vmatmul.mubr.f32.gmra.mxu0 %v199
    %v267 = vpop.f32.mrf.mxu0
    %v268 = vadd.f32 0.0, %v267
    %v269 = vpop.f32.mrf.mxu0
    %270 = vdwg.mxu0
    %v271 = vadd.f32 %v198, %v268
    %v272 = vxor.u32 %v271, 2147483648
    %v273 = vmul.f32 %v272, 1.442695
    %v274 = vpow.pop %v273
    %v275 = vadd.f32 %v274, 1.0
    %v276 = vrcp.pop %v275
    %v277 = vmul.f32 1.0, %v276
    %v278 = vtanh.pop %v271
    %v279 = vmul.f32 %v277, %v185
    %281 = vrot.lane.b32.xlu0 %v278, 64
    %v282 = vpop.permute.xlu0 %281
    %v284 = vmul.f32 %v277, %v282
    %286 = vrot.lane.b32.xlu0 %v284, 32
    %v287 = vpop.permute.xlu0 %286
    %v289 = vadd.f32 %v279, %v287
    %v290 = vtanh.pop %v289
    %292 = vrot.lane.b32.xlu0 %v290, 64
    %v293 = vpop.permute.xlu0 %292
    %v295 = vmul.f32 %v277, %v293
    %297 = vrot.lane.b32.xlu0 %v295, 32
    %v298 = vpop.permute.xlu0 %297
    %s300 = scalar_lea.vmem [#allocation12], 8
    %301 = vst.msk [vmem:[%s300] sm:$0xff] %vm89, %v298
    %s302 = scalar_lea.vmem [#allocation10], 16
    %v303 = vld [vmem:[%s302] sm:$0xff]
    %v304 = vsel %vm89, %v298, 0
    %306 = vmatprep.subr.mxu0 0.0
    %307 = vmatpush1.msra.mxu0 0.0
    %308 = vmatprep.subr.mxu0 0.0
    %309 = vmatpush1.msra.mxu0 0.0
    %310 = vmatprep.subr.mxu0 0.0
    %311 = vmatpush1.msra.mxu0 0.0
    %312 = vmatprep.subr.mxu0 0.0
    %313 = vmatpush1.msra.mxu0 0.0
    %314 = vmatprep.subr.mxu0 0.0
    %315 = vmatpush1.msra.mxu0 0.0
    %316 = vmatprep.subr.mxu0 0.0
    %317 = vmatpush1.msra.mxu0 0.0
    %318 = vmatprep.subr.mxu0 0.0
    %319 = vmatpush1.msra.mxu0 0.0
    %320 = vmatprep.subr.mxu0 0.0
    %321 = vmatpush1.msra.mxu0 0.0
    %322 = vmatprep.subr.mxu0 0.0
    %323 = vmatpush1.msra.mxu0 0.0
    %324 = vmatprep.subr.mxu0 0.0
    %325 = vmatpush1.msra.mxu0 0.0
    %326 = vmatprep.subr.mxu0 0.0
    %327 = vmatpush1.msra.mxu0 0.0
    %328 = vmatprep.subr.mxu0 0.0
    %329 = vmatpush1.msra.mxu0 0.0
    %330 = vmatprep.subr.mxu0 0.0
    %331 = vmatpush1.msra.mxu0 %v85
    %332 = vmatprep.subr.mxu0 0.0
    %333 = vmatpush1.msra.mxu0 %v84
    %334 = vmatprep.subr.mxu0 0.0
    %335 = vmatpush1.msra.mxu0 %v83
    %336 = vmatprep.subr.mxu0 0.0
    %337 = vmatpush1.msra.mxu0 %v82
    %338 = vmatprep.subr.mxu0 0.0
    %339 = vmatpush2.msra.mxu0 0.0
    %340 = vmatprep.subr.mxu0 0.0
    %341 = vmatpush2.msra.mxu0 0.0
    %342 = vmatprep.subr.mxu0 0.0
    %343 = vmatpush2.msra.mxu0 0.0
    %344 = vmatprep.subr.mxu0 0.0
    %345 = vmatpush2.msra.mxu0 0.0
    %346 = vmatprep.subr.mxu0 0.0
    %347 = vmatpush2.msra.mxu0 0.0
    %348 = vmatprep.subr.mxu0 0.0
    %349 = vmatpush2.msra.mxu0 0.0
    %350 = vmatprep.subr.mxu0 0.0
    %351 = vmatpush2.msra.mxu0 0.0
    %352 = vmatprep.subr.mxu0 0.0
    %353 = vmatpush2.msra.mxu0 0.0
    %354 = vmatprep.subr.mxu0 0.0
    %355 = vmatpush2.msra.mxu0 0.0
    %356 = vmatprep.subr.mxu0 0.0
    %357 = vmatpush2.msra.mxu0 0.0
    %358 = vmatprep.subr.mxu0 0.0
    %359 = vmatpush2.msra.mxu0 0.0
    %360 = vmatprep.subr.mxu0 0.0
    %361 = vmatpush2.msra.mxu0 0.0
    %362 = vmatprep.subr.mxu0 0.0
    %363 = vmatpush2.msra.mxu0 0.0
    %364 = vmatprep.subr.mxu0 0.0
    %365 = vmatpush2.msra.mxu0 0.0
    %366 = vmatprep.subr.mxu0 0.0
    %367 = vmatpush2.msra.mxu0 0.0
    %368 = vmatprep.subr.mxu0 0.0
    %369 = vmatpush2.msra.mxu0 0.0
    %370 = vmatprep.mubr.f32.mxu0 0.0
    %371 = vmatmul.mubr.f32.gmra.mxu0 %v304
    %v372 = vpop.f32.mrf.mxu0
    %v373 = vadd.f32 0.0, %v372
    %v374 = vpop.f32.mrf.mxu0
    %375 = vdwg.mxu0
    %v376 = vadd.f32 %v303, %v373
    %v377 = vxor.u32 %v376, 2147483648
    %v378 = vmul.f32 %v377, 1.442695
    %v379 = vpow.pop %v378
    %v380 = vadd.f32 %v379, 1.0
    %v381 = vrcp.pop %v380
    %v382 = vmul.f32 1.0, %v381
    %v383 = vtanh.pop %v376
    %v384 = vmul.f32 %v382, %v289
    %386 = vrot.lane.b32.xlu0 %v383, 64
    %v387 = vpop.permute.xlu0 %386
    %v389 = vmul.f32 %v382, %v387
    %391 = vrot.lane.b32.xlu0 %v389, 32
    %v392 = vpop.permute.xlu0 %391
    %v394 = vadd.f32 %v384, %v392
    %v395 = vtanh.pop %v394
    %397 = vrot.lane.b32.xlu0 %v395, 64
    %v398 = vpop.permute.xlu0 %397
    %v400 = vmul.f32 %v382, %v398
    %402 = vrot.lane.b32.xlu0 %v400, 32
    %v403 = vpop.permute.xlu0 %402
    %s405 = scalar_lea.vmem [#allocation12], 16
    %406 = vst.msk [vmem:[%s405] sm:$0xff] %vm89, %v403
    %s407 = scalar_lea.vmem [#allocation10], 24
    %v408 = vld [vmem:[%s407] sm:$0xff]
    %v409 = vsel %vm89, %v403, 0
    %411 = vmatprep.subr.mxu0 0.0
    %412 = vmatpush1.msra.mxu0 0.0
    %413 = vmatprep.subr.mxu0 0.0
    %414 = vmatpush1.msra.mxu0 0.0
    %415 = vmatprep.subr.mxu0 0.0
    %416 = vmatpush1.msra.mxu0 0.0
    %417 = vmatprep.subr.mxu0 0.0
    %418 = vmatpush1.msra.mxu0 0.0
    %419 = vmatprep.subr.mxu0 0.0
    %420 = vmatpush1.msra.mxu0 0.0
    %421 = vmatprep.subr.mxu0 0.0
    %422 = vmatpush1.msra.mxu0 0.0
    %423 = vmatprep.subr.mxu0 0.0
    %424 = vmatpush1.msra.mxu0 0.0
    %425 = vmatprep.subr.mxu0 0.0
    %426 = vmatpush1.msra.mxu0 0.0
    %427 = vmatprep.subr.mxu0 0.0
    %428 = vmatpush1.msra.mxu0 0.0
    %429 = vmatprep.subr.mxu0 0.0
    %430 = vmatpush1.msra.mxu0 0.0
    %431 = vmatprep.subr.mxu0 0.0
    %432 = vmatpush1.msra.mxu0 0.0
    %433 = vmatprep.subr.mxu0 0.0
    %434 = vmatpush1.msra.mxu0 0.0
    %435 = vmatprep.subr.mxu0 0.0
    %436 = vmatpush1.msra.mxu0 %v85
    %437 = vmatprep.subr.mxu0 0.0
    %438 = vmatpush1.msra.mxu0 %v84
    %439 = vmatprep.subr.mxu0 0.0
    %440 = vmatpush1.msra.mxu0 %v83
    %441 = vmatprep.subr.mxu0 0.0
    %442 = vmatpush1.msra.mxu0 %v82
    %443 = vmatprep.subr.mxu0 0.0
    %444 = vmatpush2.msra.mxu0 0.0
    %445 = vmatprep.subr.mxu0 0.0
    %446 = vmatpush2.msra.mxu0 0.0
    %447 = vmatprep.subr.mxu0 0.0
    %448 = vmatpush2.msra.mxu0 0.0
    %449 = vmatprep.subr.mxu0 0.0
    %450 = vmatpush2.msra.mxu0 0.0
    %451 = vmatprep.subr.mxu0 0.0
    %452 = vmatpush2.msra.mxu0 0.0
    %453 = vmatprep.subr.mxu0 0.0
    %454 = vmatpush2.msra.mxu0 0.0
    %455 = vmatprep.subr.mxu0 0.0
    %456 = vmatpush2.msra.mxu0 0.0
    %457 = vmatprep.subr.mxu0 0.0
    %458 = vmatpush2.msra.mxu0 0.0
    %459 = vmatprep.subr.mxu0 0.0
    %460 = vmatpush2.msra.mxu0 0.0
    %461 = vmatprep.subr.mxu0 0.0
    %462 = vmatpush2.msra.mxu0 0.0
    %463 = vmatprep.subr.mxu0 0.0
    %464 = vmatpush2.msra.mxu0 0.0
    %465 = vmatprep.subr.mxu0 0.0
    %466 = vmatpush2.msra.mxu0 0.0
    %467 = vmatprep.subr.mxu0 0.0
    %468 = vmatpush2.msra.mxu0 0.0
    %469 = vmatprep.subr.mxu0 0.0
    %470 = vmatpush2.msra.mxu0 0.0
    %471 = vmatprep.subr.mxu0 0.0
    %472 = vmatpush2.msra.mxu0 0.0
    %473 = vmatprep.subr.mxu0 0.0
    %474 = vmatpush2.msra.mxu0 0.0
    %475 = vmatprep.mubr.f32.mxu0 0.0
    %476 = vmatmul.mubr.f32.gmra.mxu0 %v409
    %v477 = vpop.f32.mrf.mxu0
    %v478 = vadd.f32 0.0, %v477
    %v479 = vpop.f32.mrf.mxu0
    %480 = vdwg.mxu0
    %v481 = vadd.f32 %v408, %v478
    %v482 = vxor.u32 %v481, 2147483648
    %v483 = vmul.f32 %v482, 1.442695
    %v484 = vpow.pop %v483
    %v485 = vadd.f32 %v484, 1.0
    %v486 = vrcp.pop %v485
    %v487 = vmul.f32 1.0, %v486
    %v488 = vtanh.pop %v481
    %v489 = vmul.f32 %v487, %v394
    %491 = vrot.lane.b32.xlu0 %v488, 64
    %v492 = vpop.permute.xlu0 %491
    %v494 = vmul.f32 %v487, %v492
    %496 = vrot.lane.b32.xlu0 %v494, 32
    %v497 = vpop.permute.xlu0 %496
    %v499 = vadd.f32 %v489, %v497
    %v500 = vtanh.pop %v499
    %502 = vrot.lane.b32.xlu0 %v500, 64
    %v503 = vpop.permute.xlu0 %502
    %v505 = vmul.f32 %v487, %v503
    %507 = vrot.lane.b32.xlu0 %v505, 32
    %v508 = vpop.permute.xlu0 %507
    %s510 = scalar_lea.vmem [#allocation12], 24
    %511 = vst.msk [vmem:[%s510] sm:$0xff] %vm89, %v508
    %s512 = scalar_lea.vmem [#allocation10], 32
    %v513 = vld [vmem:[%s512] sm:$0xff]
    %v514 = vsel %vm89, %v508, 0
    %516 = vmatprep.subr.mxu0 0.0
    %517 = vmatpush1.msra.mxu0 0.0
    %518 = vmatprep.subr.mxu0 0.0
    %519 = vmatpush1.msra.mxu0 0.0
    %520 = vmatprep.subr.mxu0 0.0
    %521 = vmatpush1.msra.mxu0 0.0
    %522 = vmatprep.subr.mxu0 0.0
    %523 = vmatpush1.msra.mxu0 0.0
    %524 = vmatprep.subr.mxu0 0.0
    %525 = vmatpush1.msra.mxu0 0.0
    %526 = vmatprep.subr.mxu0 0.0
    %527 = vmatpush1.msra.mxu0 0.0
    %528 = vmatprep.subr.mxu0 0.0
    %529 = vmatpush1.msra.mxu0 0.0
    %530 = vmatprep.subr.mxu0 0.0
    %531 = vmatpush1.msra.mxu0 0.0
    %532 = vmatprep.subr.mxu0 0.0
    %533 = vmatpush1.msra.mxu0 0.0
    %534 = vmatprep.subr.mxu0 0.0
    %535 = vmatpush1.msra.mxu0 0.0
    %536 = vmatprep.subr.mxu0 0.0
    %537 = vmatpush1.msra.mxu0 0.0
    %538 = vmatprep.subr.mxu0 0.0
    %539 = vmatpush1.msra.mxu0 0.0
    %540 = vmatprep.subr.mxu0 0.0
    %541 = vmatpush1.msra.mxu0 %v85
    %542 = vmatprep.subr.mxu0 0.0
    %543 = vmatpush1.msra.mxu0 %v84
    %544 = vmatprep.subr.mxu0 0.0
    %545 = vmatpush1.msra.mxu0 %v83
    %546 = vmatprep.subr.mxu0 0.0
    %547 = vmatpush1.msra.mxu0 %v82
    %548 = vmatprep.subr.mxu0 0.0
    %549 = vmatpush2.msra.mxu0 0.0
    %550 = vmatprep.subr.mxu0 0.0
    %551 = vmatpush2.msra.mxu0 0.0
    %552 = vmatprep.subr.mxu0 0.0
    %553 = vmatpush2.msra.mxu0 0.0
    %554 = vmatprep.subr.mxu0 0.0
    %555 = vmatpush2.msra.mxu0 0.0
    %556 = vmatprep.subr.mxu0 0.0
    %557 = vmatpush2.msra.mxu0 0.0
    %558 = vmatprep.subr.mxu0 0.0
    %559 = vmatpush2.msra.mxu0 0.0
    %560 = vmatprep.subr.mxu0 0.0
    %561 = vmatpush2.msra.mxu0 0.0
    %562 = vmatprep.subr.mxu0 0.0
    %563 = vmatpush2.msra.mxu0 0.0
    %564 = vmatprep.subr.mxu0 0.0
    %565 = vmatpush2.msra.mxu0 0.0
    %566 = vmatprep.subr.mxu0 0.0
    %567 = vmatpush2.msra.mxu0 0.0
    %568 = vmatprep.subr.mxu0 0.0
    %569 = vmatpush2.msra.mxu0 0.0
    %570 = vmatprep.subr.mxu0 0.0
    %571 = vmatpush2.msra.mxu0 0.0
    %572 = vmatprep.subr.mxu0 0.0
    %573 = vmatpush2.msra.mxu0 0.0
    %574 = vmatprep.subr.mxu0 0.0
    %575 = vmatpush2.msra.mxu0 0.0
    %576 = vmatprep.subr.mxu0 0.0
    %577 = vmatpush2.msra.mxu0 0.0
    %578 = vmatprep.subr.mxu0 0.0
    %579 = vmatpush2.msra.mxu0 0.0
    %580 = vmatprep.mubr.f32.mxu0 0.0
    %581 = vmatmul.mubr.f32.gmra.mxu0 %v514
    %v582 = vpop.f32.mrf.mxu0
    %v583 = vadd.f32 0.0, %v582
    %v584 = vpop.f32.mrf.mxu0
    %585 = vdwg.mxu0
    %v586 = vadd.f32 %v513, %v583
    %v587 = vxor.u32 %v586, 2147483648
    %v588 = vmul.f32 %v587, 1.442695
    %v589 = vpow.pop %v588
    %v590 = vadd.f32 %v589, 1.0
    %v591 = vrcp.pop %v590
    %v592 = vmul.f32 1.0, %v591
    %v593 = vtanh.pop %v586
    %v594 = vmul.f32 %v592, %v499
    %596 = vrot.lane.b32.xlu0 %v593, 64
    %v597 = vpop.permute.xlu0 %596
    %v599 = vmul.f32 %v592, %v597
    %601 = vrot.lane.b32.xlu0 %v599, 32
    %v602 = vpop.permute.xlu0 %601
    %v604 = vadd.f32 %v594, %v602
    %v605 = vtanh.pop %v604
    %607 = vrot.lane.b32.xlu0 %v605, 64
    %v608 = vpop.permute.xlu0 %607
    %v610 = vmul.f32 %v592, %v608
    %612 = vrot.lane.b32.xlu0 %v610, 32
    %v613 = vpop.permute.xlu0 %612
    %s615 = scalar_lea.vmem [#allocation12], 32
    %616 = vst.msk [vmem:[%s615] sm:$0xff] %vm89, %v613
    %s617 = scalar_lea.vmem [#allocation10], 40
    %v618 = vld [vmem:[%s617] sm:$0xff]
    %v619 = vsel %vm89, %v613, 0
    %621 = vmatprep.subr.mxu0 0.0
    %622 = vmatpush1.msra.mxu0 0.0
    %623 = vmatprep.subr.mxu0 0.0
    %624 = vmatpush1.msra.mxu0 0.0
    %625 = vmatprep.subr.mxu0 0.0
    %626 = vmatpush1.msra.mxu0 0.0
    %627 = vmatprep.subr.mxu0 0.0
    %628 = vmatpush1.msra.mxu0 0.0
    %629 = vmatprep.subr.mxu0 0.0
    %630 = vmatpush1.msra.mxu0 0.0
    %631 = vmatprep.subr.mxu0 0.0
    %632 = vmatpush1.msra.mxu0 0.0
    %633 = vmatprep.subr.mxu0 0.0
    %634 = vmatpush1.msra.mxu0 0.0
    %635 = vmatprep.subr.mxu0 0.0
    %636 = vmatpush1.msra.mxu0 0.0
    %637 = vmatprep.subr.mxu0 0.0
    %638 = vmatpush1.msra.mxu0 0.0
    %639 = vmatprep.subr.mxu0 0.0
    %640 = vmatpush1.msra.mxu0 0.0
    %641 = vmatprep.subr.mxu0 0.0
    %642 = vmatpush1.msra.mxu0 0.0
    %643 = vmatprep.subr.mxu0 0.0
    %644 = vmatpush1.msra.mxu0 0.0
    %645 = vmatprep.subr.mxu0 0.0
    %646 = vmatpush1.msra.mxu0 %v85
    %647 = vmatprep.subr.mxu0 0.0
    %648 = vmatpush1.msra.mxu0 %v84
    %649 = vmatprep.subr.mxu0 0.0
    %650 = vmatpush1.msra.mxu0 %v83
    %651 = vmatprep.subr.mxu0 0.0
    %652 = vmatpush1.msra.mxu0 %v82
    %653 = vmatprep.subr.mxu0 0.0
    %654 = vmatpush2.msra.mxu0 0.0
    %655 = vmatprep.subr.mxu0 0.0
    %656 = vmatpush2.msra.mxu0 0.0
    %657 = vmatprep.subr.mxu0 0.0
    %658 = vmatpush2.msra.mxu0 0.0
    %659 = vmatprep.subr.mxu0 0.0
    %660 = vmatpush2.msra.mxu0 0.0
    %661 = vmatprep.subr.mxu0 0.0
    %662 = vmatpush2.msra.mxu0 0.0
    %663 = vmatprep.subr.mxu0 0.0
    %664 = vmatpush2.msra.mxu0 0.0
    %665 = vmatprep.subr.mxu0 0.0
    %666 = vmatpush2.msra.mxu0 0.0
    %667 = vmatprep.subr.mxu0 0.0
    %668 = vmatpush2.msra.mxu0 0.0
    %669 = vmatprep.subr.mxu0 0.0
    %670 = vmatpush2.msra.mxu0 0.0
    %671 = vmatprep.subr.mxu0 0.0
    %672 = vmatpush2.msra.mxu0 0.0
    %673 = vmatprep.subr.mxu0 0.0
    %674 = vmatpush2.msra.mxu0 0.0
    %675 = vmatprep.subr.mxu0 0.0
    %676 = vmatpush2.msra.mxu0 0.0
    %677 = vmatprep.subr.mxu0 0.0
    %678 = vmatpush2.msra.mxu0 0.0
    %679 = vmatprep.subr.mxu0 0.0
    %680 = vmatpush2.msra.mxu0 0.0
    %681 = vmatprep.subr.mxu0 0.0
    %682 = vmatpush2.msra.mxu0 0.0
    %683 = vmatprep.subr.mxu0 0.0
    %684 = vmatpush2.msra.mxu0 0.0
    %685 = vmatprep.mubr.f32.mxu0 0.0
    %686 = vmatmul.mubr.f32.gmra.mxu0 %v619
    %v687 = vpop.f32.mrf.mxu0
    %v688 = vadd.f32 0.0, %v687
    %v689 = vpop.f32.mrf.mxu0
    %690 = vdwg.mxu0
    %v691 = vadd.f32 %v618, %v688
    %v692 = vxor.u32 %v691, 2147483648
    %v693 = vmul.f32 %v692, 1.442695
    %v694 = vpow.pop %v693
    %v695 = vadd.f32 %v694, 1.0
    %v696 = vrcp.pop %v695
    %v697 = vmul.f32 1.0, %v696
    %v698 = vtanh.pop %v691
    %v699 = vmul.f32 %v697, %v604
    %701 = vrot.lane.b32.xlu0 %v698, 64
    %v702 = vpop.permute.xlu0 %701
    %v704 = vmul.f32 %v697, %v702
    %706 = vrot.lane.b32.xlu0 %v704, 32
    %v707 = vpop.permute.xlu0 %706
    %v709 = vadd.f32 %v699, %v707
    %v710 = vtanh.pop %v709
    %712 = vrot.lane.b32.xlu0 %v710, 64
    %v713 = vpop.permute.xlu0 %712
    %v715 = vmul.f32 %v697, %v713
    %717 = vrot.lane.b32.xlu0 %v715, 32
    %v718 = vpop.permute.xlu0 %717
    %s720 = scalar_lea.vmem [#allocation12], 40
    %721 = vst.msk [vmem:[%s720] sm:$0xff] %vm89, %v718
    %s722 = scalar_lea.vmem [#allocation10], 48
    %v723 = vld [vmem:[%s722] sm:$0xff]
    %v724 = vsel %vm89, %v718, 0
    %726 = vmatprep.subr.mxu0 0.0
    %727 = vmatpush1.msra.mxu0 0.0
    %728 = vmatprep.subr.mxu0 0.0
    %729 = vmatpush1.msra.mxu0 0.0
    %730 = vmatprep.subr.mxu0 0.0
    %731 = vmatpush1.msra.mxu0 0.0
    %732 = vmatprep.subr.mxu0 0.0
    %733 = vmatpush1.msra.mxu0 0.0
    %734 = vmatprep.subr.mxu0 0.0
    %735 = vmatpush1.msra.mxu0 0.0
    %736 = vmatprep.subr.mxu0 0.0
    %737 = vmatpush1.msra.mxu0 0.0
    %738 = vmatprep.subr.mxu0 0.0
    %739 = vmatpush1.msra.mxu0 0.0
    %740 = vmatprep.subr.mxu0 0.0
    %741 = vmatpush1.msra.mxu0 0.0
    %742 = vmatprep.subr.mxu0 0.0
    %743 = vmatpush1.msra.mxu0 0.0
    %744 = vmatprep.subr.mxu0 0.0
    %745 = vmatpush1.msra.mxu0 0.0
    %746 = vmatprep.subr.mxu0 0.0
    %747 = vmatpush1.msra.mxu0 0.0
    %748 = vmatprep.subr.mxu0 0.0
    %749 = vmatpush1.msra.mxu0 0.0
    %750 = vmatprep.subr.mxu0 0.0
    %751 = vmatpush1.msra.mxu0 %v85
    %752 = vmatprep.subr.mxu0 0.0
    %753 = vmatpush1.msra.mxu0 %v84
    %754 = vmatprep.subr.mxu0 0.0
    %755 = vmatpush1.msra.mxu0 %v83
    %756 = vmatprep.subr.mxu0 0.0
    %757 = vmatpush1.msra.mxu0 %v82
    %758 = vmatprep.subr.mxu0 0.0
    %759 = vmatpush2.msra.mxu0 0.0
    %760 = vmatprep.subr.mxu0 0.0
    %761 = vmatpush2.msra.mxu0 0.0
    %762 = vmatprep.subr.mxu0 0.0
    %763 = vmatpush2.msra.mxu0 0.0
    %764 = vmatprep.subr.mxu0 0.0
    %765 = vmatpush2.msra.mxu0 0.0
    %766 = vmatprep.subr.mxu0 0.0
    %767 = vmatpush2.msra.mxu0 0.0
    %768 = vmatprep.subr.mxu0 0.0
    %769 = vmatpush2.msra.mxu0 0.0
    %770 = vmatprep.subr.mxu0 0.0
    %771 = vmatpush2.msra.mxu0 0.0
    %772 = vmatprep.subr.mxu0 0.0
    %773 = vmatpush2.msra.mxu0 0.0
    %774 = vmatprep.subr.mxu0 0.0
    %775 = vmatpush2.msra.mxu0 0.0
    %776 = vmatprep.subr.mxu0 0.0
    %777 = vmatpush2.msra.mxu0 0.0
    %778 = vmatprep.subr.mxu0 0.0
    %779 = vmatpush2.msra.mxu0 0.0
    %780 = vmatprep.subr.mxu0 0.0
    %781 = vmatpush2.msra.mxu0 0.0
    %782 = vmatprep.subr.mxu0 0.0
    %783 = vmatpush2.msra.mxu0 0.0
    %784 = vmatprep.subr.mxu0 0.0
    %785 = vmatpush2.msra.mxu0 0.0
    %786 = vmatprep.subr.mxu0 0.0
    %787 = vmatpush2.msra.mxu0 0.0
    %788 = vmatprep.subr.mxu0 0.0
    %789 = vmatpush2.msra.mxu0 0.0
    %790 = vmatprep.mubr.f32.mxu0 0.0
    %791 = vmatmul.mubr.f32.gmra.mxu0 %v724
    %v792 = vpop.f32.mrf.mxu0
    %v793 = vadd.f32 0.0, %v792
    %v794 = vpop.f32.mrf.mxu0
    %795 = vdwg.mxu0
    %v796 = vadd.f32 %v723, %v793
    %v797 = vxor.u32 %v796, 2147483648
    %v798 = vmul.f32 %v797, 1.442695
    %v799 = vpow.pop %v798
    %v800 = vadd.f32 %v799, 1.0
    %v801 = vrcp.pop %v800
    %v802 = vmul.f32 1.0, %v801
    %v803 = vtanh.pop %v796
    %v804 = vmul.f32 %v802, %v709
    %806 = vrot.lane.b32.xlu0 %v803, 64
    %v807 = vpop.permute.xlu0 %806
    %v809 = vmul.f32 %v802, %v807
    %811 = vrot.lane.b32.xlu0 %v809, 32
    %v812 = vpop.permute.xlu0 %811
    %v814 = vadd.f32 %v804, %v812
    %v815 = vtanh.pop %v814
    %817 = vrot.lane.b32.xlu0 %v815, 64
    %v818 = vpop.permute.xlu0 %817
    %v820 = vmul.f32 %v802, %v818
    %822 = vrot.lane.b32.xlu0 %v820, 32
    %v823 = vpop.permute.xlu0 %822
    %s825 = scalar_lea.vmem [#allocation12], 48
    %826 = vst.msk [vmem:[%s825] sm:$0xff] %vm89, %v823
    %s827 = scalar_lea.vmem [#allocation10], 56
    %v828 = vld [vmem:[%s827] sm:$0xff]
    %v829 = vsel %vm89, %v823, 0
    %831 = vmatprep.subr.mxu0 0.0
    %832 = vmatpush1.msra.mxu0 0.0
    %833 = vmatprep.subr.mxu0 0.0
    %834 = vmatpush1.msra.mxu0 0.0
    %835 = vmatprep.subr.mxu0 0.0
    %836 = vmatpush1.msra.mxu0 0.0
    %837 = vmatprep.subr.mxu0 0.0
    %838 = vmatpush1.msra.mxu0 0.0
    %839 = vmatprep.subr.mxu0 0.0
    %840 = vmatpush1.msra.mxu0 0.0
    %841 = vmatprep.subr.mxu0 0.0
    %842 = vmatpush1.msra.mxu0 0.0
    %843 = vmatprep.subr.mxu0 0.0
    %844 = vmatpush1.msra.mxu0 0.0
    %845 = vmatprep.subr.mxu0 0.0
    %846 = vmatpush1.msra.mxu0 0.0
    %847 = vmatprep.subr.mxu0 0.0
    %848 = vmatpush1.msra.mxu0 0.0
    %849 = vmatprep.subr.mxu0 0.0
    %850 = vmatpush1.msra.mxu0 0.0
    %851 = vmatprep.subr.mxu0 0.0
    %852 = vmatpush1.msra.mxu0 0.0
    %853 = vmatprep.subr.mxu0 0.0
    %854 = vmatpush1.msra.mxu0 0.0
    %855 = vmatprep.subr.mxu0 0.0
    %856 = vmatpush1.msra.mxu0 %v85
    %857 = vmatprep.subr.mxu0 0.0
    %858 = vmatpush1.msra.mxu0 %v84
    %859 = vmatprep.subr.mxu0 0.0
    %860 = vmatpush1.msra.mxu0 %v83
    %861 = vmatprep.subr.mxu0 0.0
    %862 = vmatpush1.msra.mxu0 %v82
    %863 = vmatprep.subr.mxu0 0.0
    %864 = vmatpush2.msra.mxu0 0.0
    %865 = vmatprep.subr.mxu0 0.0
    %866 = vmatpush2.msra.mxu0 0.0
    %867 = vmatprep.subr.mxu0 0.0
    %868 = vmatpush2.msra.mxu0 0.0
    %869 = vmatprep.subr.mxu0 0.0
    %870 = vmatpush2.msra.mxu0 0.0
    %871 = vmatprep.subr.mxu0 0.0
    %872 = vmatpush2.msra.mxu0 0.0
    %873 = vmatprep.subr.mxu0 0.0
    %874 = vmatpush2.msra.mxu0 0.0
    %875 = vmatprep.subr.mxu0 0.0
    %876 = vmatpush2.msra.mxu0 0.0
    %877 = vmatprep.subr.mxu0 0.0
    %878 = vmatpush2.msra.mxu0 0.0
    %879 = vmatprep.subr.mxu0 0.0
    %880 = vmatpush2.msra.mxu0 0.0
    %881 = vmatprep.subr.mxu0 0.0
    %882 = vmatpush2.msra.mxu0 0.0
    %883 = vmatprep.subr.mxu0 0.0
    %884 = vmatpush2.msra.mxu0 0.0
    %885 = vmatprep.subr.mxu0 0.0
    %886 = vmatpush2.msra.mxu0 0.0
    %887 = vmatprep.subr.mxu0 0.0
    %888 = vmatpush2.msra.mxu0 0.0
    %889 = vmatprep.subr.mxu0 0.0
    %890 = vmatpush2.msra.mxu0 0.0
    %891 = vmatprep.subr.mxu0 0.0
    %892 = vmatpush2.msra.mxu0 0.0
    %893 = vmatprep.subr.mxu0 0.0
    %894 = vmatpush2.msra.mxu0 0.0
    %895 = vmatprep.mubr.f32.mxu0 0.0
    %896 = vmatmul.mubr.f32.gmra.mxu0 %v829
    %v897 = vpop.f32.mrf.mxu0
    %v898 = vadd.f32 0.0, %v897
    %v899 = vpop.f32.mrf.mxu0
    %900 = vdwg.mxu0
    %v901 = vadd.f32 %v828, %v898
    %v902 = vxor.u32 %v901, 2147483648
    %v903 = vmul.f32 %v902, 1.442695
    %v904 = vpow.pop %v903
    %v905 = vadd.f32 %v904, 1.0
    %v906 = vrcp.pop %v905
    %v907 = vmul.f32 1.0, %v906
    %v908 = vtanh.pop %v901
    %v909 = vmul.f32 %v907, %v814
    %911 = vrot.lane.b32.xlu0 %v908, 64
    %v912 = vpop.permute.xlu0 %911
    %v914 = vmul.f32 %v907, %v912
    %916 = vrot.lane.b32.xlu0 %v914, 32
    %v917 = vpop.permute.xlu0 %916
    %v919 = vadd.f32 %v909, %v917
    %v920 = vtanh.pop %v919
    %922 = vrot.lane.b32.xlu0 %v920, 64
    %v923 = vpop.permute.xlu0 %922
    %v925 = vmul.f32 %v907, %v923
    %927 = vrot.lane.b32.xlu0 %v925, 32
    %v928 = vpop.permute.xlu0 %927
    %s930 = scalar_lea.vmem [#allocation12], 56
    %931 = vst.msk [vmem:[%s930] sm:$0xff] %vm89, %v928
    %932 = vst.msk [vmem:[#allocation2] sm:$0xff] %vm89, %v928
    %934 = vrot.lane.b32.xlu0 %v919, 96
    %v935 = vpop.permute.xlu0 %934
    %937 = vst.msk [vmem:[#allocation3] sm:$0xff] %vm89, %v935
    // Predicated region
    $region38: #{tpu_custom_call.1} parent=1 // pred_check
      %p938 = pneg %p73
    $region39: #{tpu_custom_call.1} parent=1 // pred_check_branch
      %940 = sbr.rel (%p938) target = $region41
    $region40: #{tpu_custom_call.1} parent=1 // pred_region
      %941 = vst.msk [vmem:[#allocation13] sm:$0xff] %vm89, %v928
      %942 = vst.msk [vmem:[#allocation15] sm:$0xff] %vm89, %v935
    $region41: #{tpu_custom_call.1} parent=1 // pred_fallthru
      _
    // Predicated region
    $region42: #{tpu_custom_call.1} parent=1 // pred_check
      _
    $region43: #{tpu_custom_call.1} parent=1 // pred_check_branch
      %944 = sbr.rel (0) target = $region45
    $region44: #{tpu_custom_call.1} parent=1 // pred_region
      %s946 = ssub.s32 1024, 1024
      %947 = vsyncadd [#allocation6], %s946
      %s948 = sshll.u32 [#allocation12], 4
      %s949 = int_to_ptr.vmem [resolvable:$true] %s948
      %954 = dma.vmem_to_hbm [thread:$0]  %s949, 1024, %s4, [#allocation6], 128, 128, 8
    $region45: #{tpu_custom_call.1} parent=1 // pred_fallthru
      _
    // Predicated region
    $region46: #{tpu_custom_call.1} parent=1 // pred_check
      _
    $region47: #{tpu_custom_call.1} parent=1 // pred_check_branch
      %956 = sbr.rel (0) target = $region49
    $region48: #{tpu_custom_call.1} parent=1 // pred_region
      %s958 = ssub.s32 128, 128
      %959 = vsyncadd [#allocation14], %s958
      %s961 = sshll.u32 [#allocation13], 4
      %s962 = int_to_ptr.vmem [resolvable:$true] %s961
      %964 = dma.vmem_to_hbm [thread:$0]  %s962, 128, %s5, [#allocation14]
    $region49: #{tpu_custom_call.1} parent=1 // pred_fallthru
      _
    // Predicated region
    $region50: #{tpu_custom_call.1} parent=1 // pred_check
      _
    $region51: #{tpu_custom_call.1} parent=1 // pred_check_branch
      %966 = sbr.rel (0) target = $region53
    $region52: #{tpu_custom_call.1} parent=1 // pred_region
      %s968 = ssub.s32 128, 128
      %969 = vsyncadd [#allocation14], %s968
      %s971 = sshll.u32 [#allocation15], 4
      %s972 = int_to_ptr.vmem [resolvable:$true] %s971
      %974 = dma.vmem_to_hbm [thread:$0]  %s972, 128, %s6, [#allocation14]
    $region53: #{tpu_custom_call.1} parent=1 // pred_fallthru
      _
    // Predicated region
    $region54: #{tpu_custom_call.1} parent=1 // pred_check
      _
    $region55: #{tpu_custom_call.1} parent=1 // pred_check_branch
      %976 = sbr.rel (0) target = $region57
    $region56: #{tpu_custom_call.1} parent=1 // pred_region
      %977 = dma.done [#allocation6], 1024
    $region57: #{tpu_custom_call.1} parent=1 // pred_fallthru
      _
    // Predicated region
    $region58: #{tpu_custom_call.1} parent=1 // pred_check
      _
    $region59: #{tpu_custom_call.1} parent=1 // pred_check_branch
      %979 = sbr.rel (0) target = $region61
    $region60: #{tpu_custom_call.1} parent=1 // pred_region
      %980 = dma.done [#allocation14], 128
    $region61: #{tpu_custom_call.1} parent=1 // pred_fallthru
      _
    // Predicated region
    $region62: #{tpu_custom_call.1} parent=1 // pred_check
      _
    $region63: #{tpu_custom_call.1} parent=1 // pred_check_branch
      %982 = sbr.rel (0) target = $region65
    $region64: #{tpu_custom_call.1} parent=1 // pred_region
      %983 = dma.done [#allocation14], 128
    $region65: #{tpu_custom_call.1} parent=1 // pred_fallthru
      _
    %984 = vsyncpa [#allocation5], 1
    %985 = vsyncpa [#allocation8], 1
    %986 = vsyncpa [#allocation11], 1
    %987 = vsyncpa [#allocation6], 1
    %988 = vsyncpa [#allocation14], 1

</llo_original>
